<compile_context>
chip_gen: v6e
topology: v6e:2x2x1
jax: 0.10.0
libtpu: 0.0.40
codegen_flags: <defaults>
</compile_context>

<pallas_src>
import functools

import jax
import jax.numpy as jnp
from jax import lax
from jax.experimental import pallas as pl
from jax.experimental.pallas import tpu as pltpu

# ----------------------------- config ---------------------------------------
HIDDEN = 32
LAYERS = 2
MAX_SEQ_LEN = 4
NUM_VOCAB = 16
TEMP = 2.0               # config.T
EDGE_DIM = 2             # ogbg-code edge features
NUM_NODETYPES = 8
NUM_NODEATTRS = 10
MAX_DEPTH = 20

NUM_NODES = 24
NUM_EDGES = 48
NUM_GRAPHS = 2

HEADS_OUT = MAX_SEQ_LEN * NUM_VOCAB   # 64 real logit columns
HEADS_PAD = 128                       # lane-dense output slab width
GRAPHS_PAD = 8                        # sublane-aligned pooled rows


# --------------------------- fused Pallas kernel -----------------------------
def fused_net_kernel(xnodes_ref, depth_ref, eidx_ref, batch_ref, eattr_ref,
                     type_emb_ref, attr_emb_ref, depth_emb_ref,
                     edge_w_ref, edge_b_ref, w1_ref, b1_ref, w2_ref, b2_ref,
                     heads_w_ref, heads_b_ref, out_ref):
    """Whole Net.forward in one kernel; everything stays resident in VMEM."""
    n = xnodes_ref.shape[0]
    e = eidx_ref.shape[1]
    g_pad = out_ref.shape[0]

    def row_one_hot(col, width):
        # col: (R, 1) int32  ->  (R, width) f32 one-hot, built on the VPU.
        iota = lax.broadcasted_iota(jnp.int32, (col.shape[0], width), 1)
        return (iota == col).astype(jnp.float32)

    # ---- node encoder: sum of type / attr / depth embedding lookups --------
    type_col = xnodes_ref[:, 0:1]                          # (N, 1)
    attr_col = xnodes_ref[:, 1:2]                          # (N, 1)
    depth_col = jnp.minimum(depth_ref[...], MAX_DEPTH)     # (N, 1)
    h = (jnp.dot(row_one_hot(type_col, type_emb_ref.shape[0]), type_emb_ref[...],
                 preferred_element_type=jnp.float32)
         + jnp.dot(row_one_hot(attr_col, attr_emb_ref.shape[0]), attr_emb_ref[...],
                   preferred_element_type=jnp.float32)
         + jnp.dot(row_one_hot(depth_col, depth_emb_ref.shape[0]), depth_emb_ref[...],
                   preferred_element_type=jnp.float32))    # (N, H)

    # ---- gather / scatter masks from edge_index (built once, reused) -------
    src_row = eidx_ref[0:1, :]                             # (1, E)
    dst_row = eidx_ref[1:2, :]                             # (1, E)
    iota_ne = lax.broadcasted_iota(jnp.int32, (n, e), 0)
    oh_src = (iota_ne == src_row).astype(jnp.float32)      # (N, E): src[e] == v
    oh_dst = (iota_ne == dst_row).astype(jnp.float32)      # (N, E): dst[e] == v

    eattr = eattr_ref[...]                                 # (E, EDGE_DIM)

    # ---- GIN conv layers (static unroll; h never leaves VMEM) --------------
    for l in range(LAYERS):
        # edge encoder Linear(EDGE_DIM, H)
        eemb = jnp.dot(eattr, edge_w_ref[l],
                       preferred_element_type=jnp.float32) + edge_b_ref[l]      # (E, H)
        # gather x_j = x[src]  ==  oh_src.T @ h
        xj = lax.dot_general(oh_src, h, (((0,), (0,)), ((), ())),
                             preferred_element_type=jnp.float32)                # (E, H)
        # message = relu(x_j + edge_emb)
        msg = jnp.maximum(xj + eemb, 0.0)                                       # (E, H)
        # scatter-add over dst nodes == oh_dst @ msg
        agg = jnp.dot(oh_dst, msg, preferred_element_type=jnp.float32)          # (N, H)
        # fea_mlp(agg + x): Linear -> ReLU -> Linear (BN-eval folded into w2/b2)
        z = agg + h
        z = jnp.maximum(
            jnp.dot(z, w1_ref[l], preferred_element_type=jnp.float32) + b1_ref[l],
            0.0)
        h = jnp.dot(z, w2_ref[l], preferred_element_type=jnp.float32) + b2_ref[l]

    # ---- JK('last') + dropout(p=0, eval) == identity ------------------------
    # ---- global_add_pool + all max_seq_len heads (1/T folded into weights) --
    iota_gn = lax.broadcasted_iota(jnp.int32, (g_pad, n), 0)
    oh_pool = (iota_gn == batch_ref[...]).astype(jnp.float32)                   # (G_pad, N)
    hg = jnp.dot(oh_pool, h, preferred_element_type=jnp.float32)                # (G_pad, H)
    out_ref[...] = (jnp.dot(hg, heads_w_ref[...],
                            preferred_element_type=jnp.float32)
                    + heads_b_ref[...])                                         # (G_pad, 128)


# --------------------------- kernel wrapper ----------------------------------
def fused_forward(params, x_nodes, node_depth, edge_index, batch_row, edge_attr):
    n = x_nodes.shape[0]
    e = edge_index.shape[1]
    args = (x_nodes, node_depth, edge_index, batch_row, edge_attr,
            params["type_emb"], params["attr_emb"], params["depth_emb"],
            params["edge_w"], params["edge_b"], params["w1"], params["b1"],
            params["w2f"], params["b2f"], params["heads_w"], params["heads_b"])

    emb_rows = (params["type_emb"].shape[0] + params["attr_emb"].shape[0]
                + params["depth_emb"].shape[0])
    flops = (2 * n * emb_rows * HIDDEN
             + LAYERS * (2 * e * EDGE_DIM * HIDDEN        # edge linear
                         + 2 * 2 * e * n * HIDDEN         # gather + scatter
                         + 2 * 2 * n * HIDDEN * HIDDEN)   # 2-layer MLP
             + 2 * GRAPHS_PAD * n * HIDDEN                # pool
             + 2 * GRAPHS_PAD * HIDDEN * HEADS_PAD)       # heads
    bytes_accessed = (sum(int(a.size) * a.dtype.itemsize for a in args)
                      + GRAPHS_PAD * HEADS_PAD * 4)

    return pl.pallas_call(
        fused_net_kernel,
        out_shape=jax.ShapeDtypeStruct((GRAPHS_PAD, HEADS_PAD), jnp.float32),
        in_specs=[pl.BlockSpec(memory_space=pltpu.MemorySpace.VMEM)] * len(args),
        out_specs=pl.BlockSpec(memory_space=pltpu.MemorySpace.VMEM),
        cost_estimate=pl.CostEstimate(flops=flops, transcendentals=0,
                                      bytes_accessed=bytes_accessed),
    )(*args)


# ----------------------------- parameters ------------------------------------
def init_params(key):
    def nrm(k, shape, scale=0.1):
        return (scale * jax.random.normal(k, shape)).astype(jnp.float32)

    keys = iter(jax.random.split(key, 3 + 6 * LAYERS + 2))
    eps = 1e-5
    # BatchNorm1d default init (gamma=1, beta=0, mean=0, var=1), eval-mode affine
    gamma = jnp.ones((1, HIDDEN), jnp.float32)
    beta = jnp.zeros((1, HIDDEN), jnp.float32)
    mean = jnp.zeros((1, HIDDEN), jnp.float32)
    var = jnp.ones((1, HIDDEN), jnp.float32)
    bn_scale = gamma / jnp.sqrt(var + eps)
    bn_shift = beta - mean * bn_scale

    edge_w, edge_b, w1, b1, w2f, b2f = [], [], [], [], [], []
    for _ in range(LAYERS):
        edge_w.append(nrm(next(keys), (EDGE_DIM, HIDDEN)))
        edge_b.append(nrm(next(keys), (1, HIDDEN)))
        w1.append(nrm(next(keys), (HIDDEN, HIDDEN)))
        b1.append(nrm(next(keys), (1, HIDDEN)))
        w2 = nrm(next(keys), (HIDDEN, HIDDEN))
        b2 = nrm(next(keys), (1, HIDDEN))
        w2f.append(w2 * bn_scale)                    # fold BN scale into Linear
        b2f.append(b2 * bn_scale + bn_shift)

    inv_t = 1.0 / TEMP                               # fold temperature into heads
    heads_w = nrm(next(keys), (HIDDEN, HEADS_OUT)) * inv_t
    heads_b = nrm(next(keys), (1, HEADS_OUT)) * inv_t
    heads_w = jnp.pad(heads_w, ((0, 0), (0, HEADS_PAD - HEADS_OUT)))
    heads_b = jnp.pad(heads_b, ((0, 0), (0, HEADS_PAD - HEADS_OUT)))

    def pad_rows(x, mult=8):
        pad = (-x.shape[0]) % mult
        return jnp.pad(x, ((0, pad), (0, 0))) if pad else x

    return {
        "type_emb": pad_rows(nrm(next(keys), (NUM_NODETYPES, HIDDEN))),
        "attr_emb": pad_rows(nrm(next(keys), (NUM_NODEATTRS, HIDDEN))),
        "depth_emb": pad_rows(nrm(next(keys), (MAX_DEPTH + 1, HIDDEN))),
        "edge_w": jnp.stack(edge_w), "edge_b": jnp.stack(edge_b),
        "w1": jnp.stack(w1), "b1": jnp.stack(b1),
        "w2f": jnp.stack(w2f), "b2f": jnp.stack(b2f),
        "heads_w": heads_w, "heads_b": heads_b,
    }


# ------------------------------ forward --------------------------------------
def net_forward(params, x_nodes, node_depth, edge_index, edge_attr, batch,
                num_graphs):
    assert num_graphs <= GRAPHS_PAD
    n = x_nodes.shape[0]
    batch_row = batch.reshape(1, n).astype(jnp.int32)
    slab = fused_forward(params,
                         x_nodes.astype(jnp.int32),
                         node_depth.astype(jnp.int32),
                         edge_index.astype(jnp.int32),
                         batch_row,
                         edge_attr.astype(jnp.float32))
    logits = slab[:num_graphs, :HEADS_OUT]
    return [logits[:, i * NUM_VOCAB:(i + 1) * NUM_VOCAB]
            for i in range(MAX_SEQ_LEN)]


# -------------------------------- main ----------------------------------------
if __name__ == "__main__":
    key = jax.random.PRNGKey(0)
    k_par, k_x, k_attr, k_depth, k_src, k_dst, k_eattr = jax.random.split(key, 7)

    params = init_params(k_par)

    # synthetic batched graph data (2 graphs, 12 nodes each)
    x_nodes = jnp.stack(
        [jax.random.randint(k_x, (NUM_NODES,), 0, NUM_NODETYPES),
         jax.random.randint(k_attr, (NUM_NODES,), 0, NUM_NODEATTRS)], axis=1)
    node_depth = jax.random.randint(k_depth, (NUM_NODES, 1), 0, MAX_DEPTH + 1)
    batch = jnp.concatenate([jnp.zeros((12,), jnp.int32),
                             jnp.ones((12,), jnp.int32)])
    # edges stay within their graph
    src0 = jax.random.randint(k_src, (NUM_EDGES // 2,), 0, 12)
    dst0 = jax.random.randint(k_dst, (NUM_EDGES // 2,), 0, 12)
    src1 = jax.random.randint(k_src, (NUM_EDGES // 2,), 12, 24)
    dst1 = jax.random.randint(k_dst, (NUM_EDGES // 2,), 12, 24)
    edge_index = jnp.stack([jnp.concatenate([src0, src1]),
                            jnp.concatenate([dst0, dst1])], axis=0)
    edge_attr = jax.random.normal(k_eattr, (NUM_EDGES, EDGE_DIM),
                                  dtype=jnp.float32)

    fwd = jax.jit(functools.partial(net_forward, num_graphs=NUM_GRAPHS))
    preds = fwd(params, x_nodes, node_depth, edge_index, edge_attr, batch)
    preds = [jax.block_until_ready(p) for p in preds]

    assert len(preds) == MAX_SEQ_LEN
    for p in preds:
        assert p.shape == (NUM_GRAPHS, NUM_VOCAB)
        assert bool(jnp.all(jnp.isfinite(p)))
    print("KERNEL_OK")
</pallas_src>

<mosaic_0001>
module attributes {stable_mosaic.version = 11 : i64} {
  func.func @fused_net_kernel(%arg0: memref<24x2xi32, #tpu.memory_space<vmem>>, %arg1: memref<24x1xi32, #tpu.memory_space<vmem>>, %arg2: memref<2x48xi32, #tpu.memory_space<vmem>>, %arg3: memref<1x24xi32, #tpu.memory_space<vmem>>, %arg4: memref<48x2xf32, #tpu.memory_space<vmem>>, %arg5: memref<8x32xf32, #tpu.memory_space<vmem>>, %arg6: memref<16x32xf32, #tpu.memory_space<vmem>>, %arg7: memref<24x32xf32, #tpu.memory_space<vmem>>, %arg8: memref<2x2x32xf32, #tpu.memory_space<vmem>>, %arg9: memref<2x1x32xf32, #tpu.memory_space<vmem>>, %arg10: memref<2x32x32xf32, #tpu.memory_space<vmem>>, %arg11: memref<2x1x32xf32, #tpu.memory_space<vmem>>, %arg12: memref<2x32x32xf32, #tpu.memory_space<vmem>>, %arg13: memref<2x1x32xf32, #tpu.memory_space<vmem>>, %arg14: memref<32x128xf32, #tpu.memory_space<vmem>>, %arg15: memref<1x128xf32, #tpu.memory_space<vmem>>, %arg16: memref<8x128xf32, #tpu.memory_space<vmem>>) attributes {dimension_semantics = [], scalar_prefetch = 0 : i64, scratch_operands = 0 : i64, tpu.core_type = #tpu.core_type<tc>} {
    %c0 = arith.constant 0 : index
    %c0_0 = arith.constant 0 : index
    %0 = vector.load %arg0[%c0, %c0_0] : memref<24x2xi32, #tpu.memory_space<vmem>>, vector<24x1xi32>
    %c0_1 = arith.constant 0 : index
    %c1 = arith.constant 1 : index
    %1 = vector.load %arg0[%c0_1, %c1] : memref<24x2xi32, #tpu.memory_space<vmem>>, vector<24x1xi32>
    %c0_2 = arith.constant 0 : index
    %c0_3 = arith.constant 0 : index
    %2 = vector.load %arg1[%c0_2, %c0_3] : memref<24x1xi32, #tpu.memory_space<vmem>>, vector<24x1xi32>
    %c20_i32 = arith.constant 20 : i32
    %3 = vector.broadcast %c20_i32 : i32 to vector<24x1xi32>
    %4 = arith.minsi %2, %3 : vector<24x1xi32>
    %5 = tpu.iota {dimensions = array<i32: 1>} : vector<24x8xi32>
    %6 = vector.broadcast %0 : vector<24x1xi32> to vector<24x8xi32>
    %7 = arith.cmpi eq, %5, %6 : vector<24x8xi32>
    %8 = arith.extui %7 : vector<24x8xi1> to vector<24x8xi32>
    %9 = arith.sitofp %8 : vector<24x8xi32> to vector<24x8xf32>
    %c0_4 = arith.constant 0 : index
    %c0_5 = arith.constant 0 : index
    %10 = vector.load %arg5[%c0_4, %c0_5] : memref<8x32xf32, #tpu.memory_space<vmem>>, vector<8x32xf32>
    %cst = arith.constant dense<0.000000e+00> : vector<24x32xf32>
    %11 = tpu.matmul %9, %10, %cst {dimension_numbers = #tpu.dot_dimension_numbers<[1], [0], [0], [1], [0, 0, 1, 1], [], []>} : vector<24x8xf32>, vector<8x32xf32>, vector<24x32xf32> -> vector<24x32xf32>
    %12 = tpu.iota {dimensions = array<i32: 1>} : vector<24x16xi32>
    %13 = vector.broadcast %1 : vector<24x1xi32> to vector<24x16xi32>
    %14 = arith.cmpi eq, %12, %13 : vector<24x16xi32>
    %15 = arith.extui %14 : vector<24x16xi1> to vector<24x16xi32>
    %16 = arith.sitofp %15 : vector<24x16xi32> to vector<24x16xf32>
    %c0_6 = arith.constant 0 : index
    %c0_7 = arith.constant 0 : index
    %17 = vector.load %arg6[%c0_6, %c0_7] : memref<16x32xf32, #tpu.memory_space<vmem>>, vector<16x32xf32>
    %cst_8 = arith.constant dense<0.000000e+00> : vector<24x32xf32>
    %18 = tpu.matmul %16, %17, %cst_8 {dimension_numbers = #tpu.dot_dimension_numbers<[1], [0], [0], [1], [0, 0, 1, 1], [], []>} : vector<24x16xf32>, vector<16x32xf32>, vector<24x32xf32> -> vector<24x32xf32>
    %19 = arith.addf %11, %18 : vector<24x32xf32>
    %20 = tpu.iota {dimensions = array<i32: 1>} : vector<24x24xi32>
    %21 = vector.broadcast %4 : vector<24x1xi32> to vector<24x24xi32>
    %22 = arith.cmpi eq, %20, %21 : vector<24x24xi32>
    %23 = arith.extui %22 : vector<24x24xi1> to vector<24x24xi32>
    %24 = arith.sitofp %23 : vector<24x24xi32> to vector<24x24xf32>
    %c0_9 = arith.constant 0 : index
    %c0_10 = arith.constant 0 : index
    %25 = vector.load %arg7[%c0_9, %c0_10] : memref<24x32xf32, #tpu.memory_space<vmem>>, vector<24x32xf32>
    %cst_11 = arith.constant dense<0.000000e+00> : vector<24x32xf32>
    %26 = tpu.matmul %24, %25, %cst_11 {dimension_numbers = #tpu.dot_dimension_numbers<[1], [0], [0], [1], [0, 0, 1, 1], [], []>} : vector<24x24xf32>, vector<24x32xf32>, vector<24x32xf32> -> vector<24x32xf32>
    %27 = arith.addf %19, %26 : vector<24x32xf32>
    %c0_12 = arith.constant 0 : index
    %c0_13 = arith.constant 0 : index
    %28 = vector.load %arg2[%c0_12, %c0_13] : memref<2x48xi32, #tpu.memory_space<vmem>>, vector<1x48xi32>
    %c1_14 = arith.constant 1 : index
    %c0_15 = arith.constant 0 : index
    %29 = vector.load %arg2[%c1_14, %c0_15] : memref<2x48xi32, #tpu.memory_space<vmem>>, vector<1x48xi32>
    %30 = tpu.iota {dimensions = array<i32: 0>} : vector<24x48xi32>
    %31 = vector.broadcast %28 : vector<1x48xi32> to vector<24x48xi32>
    %32 = arith.cmpi eq, %30, %31 : vector<24x48xi32>
    %33 = arith.extui %32 : vector<24x48xi1> to vector<24x48xi32>
    %34 = arith.sitofp %33 : vector<24x48xi32> to vector<24x48xf32>
    %35 = vector.broadcast %29 : vector<1x48xi32> to vector<24x48xi32>
    %36 = arith.cmpi eq, %30, %35 : vector<24x48xi32>
    %37 = arith.extui %36 : vector<24x48xi1> to vector<24x48xi32>
    %38 = arith.sitofp %37 : vector<24x48xi32> to vector<24x48xf32>
    %c0_16 = arith.constant 0 : index
    %c0_17 = arith.constant 0 : index
    %39 = vector.load %arg4[%c0_16, %c0_17] : memref<48x2xf32, #tpu.memory_space<vmem>>, vector<48x2xf32>
    %c0_18 = arith.constant 0 : index
    %c0_19 = arith.constant 0 : index
    %c0_20 = arith.constant 0 : index
    %40 = vector.load %arg8[%c0_18, %c0_19, %c0_20] : memref<2x2x32xf32, #tpu.memory_space<vmem>>, vector<1x2x32xf32>
    %41 = vector.shape_cast %40 : vector<1x2x32xf32> to vector<2x32xf32>
    %cst_21 = arith.constant dense<0.000000e+00> : vector<48x32xf32>
    %42 = tpu.matmul %39, %41, %cst_21 {dimension_numbers = #tpu.dot_dimension_numbers<[1], [0], [0], [1], [0, 0, 1, 1], [], []>} : vector<48x2xf32>, vector<2x32xf32>, vector<48x32xf32> -> vector<48x32xf32>
    %c0_22 = arith.constant 0 : index
    %c0_23 = arith.constant 0 : index
    %c0_24 = arith.constant 0 : index
    %43 = vector.load %arg9[%c0_22, %c0_23, %c0_24] : memref<2x1x32xf32, #tpu.memory_space<vmem>>, vector<1x1x32xf32>
    %44 = vector.shape_cast %43 : vector<1x1x32xf32> to vector<1x32xf32>
    %45 = vector.broadcast %44 : vector<1x32xf32> to vector<48x32xf32>
    %46 = arith.addf %42, %45 : vector<48x32xf32>
    %cst_25 = arith.constant dense<0.000000e+00> : vector<48x32xf32>
    %47 = tpu.matmul %34, %27, %cst_25 {dimension_numbers = #tpu.dot_dimension_numbers<[0], [0], [1], [1], [0, 1, 1, 1], [], []>} : vector<24x48xf32>, vector<24x32xf32>, vector<48x32xf32> -> vector<48x32xf32>
    %48 = arith.addf %47, %46 : vector<48x32xf32>
    %cst_26 = arith.constant 0.000000e+00 : f32
    %49 = vector.broadcast %cst_26 : f32 to vector<48x32xf32>
    %50 = arith.maximumf %48, %49 : vector<48x32xf32>
    %cst_27 = arith.constant dense<0.000000e+00> : vector<24x32xf32>
    %51 = tpu.matmul %38, %50, %cst_27 {dimension_numbers = #tpu.dot_dimension_numbers<[1], [0], [0], [1], [0, 0, 1, 1], [], []>} : vector<24x48xf32>, vector<48x32xf32>, vector<24x32xf32> -> vector<24x32xf32>
    %52 = arith.addf %51, %27 : vector<24x32xf32>
    %c0_28 = arith.constant 0 : index
    %c0_29 = arith.constant 0 : index
    %c0_30 = arith.constant 0 : index
    %53 = vector.load %arg10[%c0_28, %c0_29, %c0_30] : memref<2x32x32xf32, #tpu.memory_space<vmem>>, vector<1x32x32xf32>
    %54 = vector.shape_cast %53 : vector<1x32x32xf32> to vector<32x32xf32>
    %cst_31 = arith.constant dense<0.000000e+00> : vector<24x32xf32>
    %55 = tpu.matmul %52, %54, %cst_31 {dimension_numbers = #tpu.dot_dimension_numbers<[1], [0], [0], [1], [0, 0, 1, 1], [], []>} : vector<24x32xf32>, vector<32x32xf32>, vector<24x32xf32> -> vector<24x32xf32>
    %c0_32 = arith.constant 0 : index
    %c0_33 = arith.constant 0 : index
    %c0_34 = arith.constant 0 : index
    %56 = vector.load %arg11[%c0_32, %c0_33, %c0_34] : memref<2x1x32xf32, #tpu.memory_space<vmem>>, vector<1x1x32xf32>
    %57 = vector.shape_cast %56 : vector<1x1x32xf32> to vector<1x32xf32>
    %58 = vector.broadcast %57 : vector<1x32xf32> to vector<24x32xf32>
    %59 = arith.addf %55, %58 : vector<24x32xf32>
    %cst_35 = arith.constant 0.000000e+00 : f32
    %60 = vector.broadcast %cst_35 : f32 to vector<24x32xf32>
    %61 = arith.maximumf %59, %60 : vector<24x32xf32>
    %c0_36 = arith.constant 0 : index
    %c0_37 = arith.constant 0 : index
    %c0_38 = arith.constant 0 : index
    %62 = vector.load %arg12[%c0_36, %c0_37, %c0_38] : memref<2x32x32xf32, #tpu.memory_space<vmem>>, vector<1x32x32xf32>
    %63 = vector.shape_cast %62 : vector<1x32x32xf32> to vector<32x32xf32>
    %cst_39 = arith.constant dense<0.000000e+00> : vector<24x32xf32>
    %64 = tpu.matmul %61, %63, %cst_39 {dimension_numbers = #tpu.dot_dimension_numbers<[1], [0], [0], [1], [0, 0, 1, 1], [], []>} : vector<24x32xf32>, vector<32x32xf32>, vector<24x32xf32> -> vector<24x32xf32>
    %c0_40 = arith.constant 0 : index
    %c0_41 = arith.constant 0 : index
    %c0_42 = arith.constant 0 : index
    %65 = vector.load %arg13[%c0_40, %c0_41, %c0_42] : memref<2x1x32xf32, #tpu.memory_space<vmem>>, vector<1x1x32xf32>
    %66 = vector.shape_cast %65 : vector<1x1x32xf32> to vector<1x32xf32>
    %67 = vector.broadcast %66 : vector<1x32xf32> to vector<24x32xf32>
    %68 = arith.addf %64, %67 : vector<24x32xf32>
    %c1_43 = arith.constant 1 : index
    %c0_44 = arith.constant 0 : index
    %c0_45 = arith.constant 0 : index
    %69 = vector.load %arg8[%c1_43, %c0_44, %c0_45] : memref<2x2x32xf32, #tpu.memory_space<vmem>>, vector<1x2x32xf32>
    %70 = vector.shape_cast %69 : vector<1x2x32xf32> to vector<2x32xf32>
    %cst_46 = arith.constant dense<0.000000e+00> : vector<48x32xf32>
    %71 = tpu.matmul %39, %70, %cst_46 {dimension_numbers = #tpu.dot_dimension_numbers<[1], [0], [0], [1], [0, 0, 1, 1], [], []>} : vector<48x2xf32>, vector<2x32xf32>, vector<48x32xf32> -> vector<48x32xf32>
    %c1_47 = arith.constant 1 : index
    %c0_48 = arith.constant 0 : index
    %c0_49 = arith.constant 0 : index
    %72 = vector.load %arg9[%c1_47, %c0_48, %c0_49] : memref<2x1x32xf32, #tpu.memory_space<vmem>>, vector<1x1x32xf32>
    %73 = vector.shape_cast %72 : vector<1x1x32xf32> to vector<1x32xf32>
    %74 = vector.broadcast %73 : vector<1x32xf32> to vector<48x32xf32>
    %75 = arith.addf %71, %74 : vector<48x32xf32>
    %cst_50 = arith.constant dense<0.000000e+00> : vector<48x32xf32>
    %76 = tpu.matmul %34, %68, %cst_50 {dimension_numbers = #tpu.dot_dimension_numbers<[0], [0], [1], [1], [0, 1, 1, 1], [], []>} : vector<24x48xf32>, vector<24x32xf32>, vector<48x32xf32> -> vector<48x32xf32>
    %77 = arith.addf %76, %75 : vector<48x32xf32>
    %cst_51 = arith.constant 0.000000e+00 : f32
    %78 = vector.broadcast %cst_51 : f32 to vector<48x32xf32>
    %79 = arith.maximumf %77, %78 : vector<48x32xf32>
    %cst_52 = arith.constant dense<0.000000e+00> : vector<24x32xf32>
    %80 = tpu.matmul %38, %79, %cst_52 {dimension_numbers = #tpu.dot_dimension_numbers<[1], [0], [0], [1], [0, 0, 1, 1], [], []>} : vector<24x48xf32>, vector<48x32xf32>, vector<24x32xf32> -> vector<24x32xf32>
    %81 = arith.addf %80, %68 : vector<24x32xf32>
    %c1_53 = arith.constant 1 : index
    %c0_54 = arith.constant 0 : index
    %c0_55 = arith.constant 0 : index
    %82 = vector.load %arg10[%c1_53, %c0_54, %c0_55] : memref<2x32x32xf32, #tpu.memory_space<vmem>>, vector<1x32x32xf32>
    %83 = vector.shape_cast %82 : vector<1x32x32xf32> to vector<32x32xf32>
    %cst_56 = arith.constant dense<0.000000e+00> : vector<24x32xf32>
    %84 = tpu.matmul %81, %83, %cst_56 {dimension_numbers = #tpu.dot_dimension_numbers<[1], [0], [0], [1], [0, 0, 1, 1], [], []>} : vector<24x32xf32>, vector<32x32xf32>, vector<24x32xf32> -> vector<24x32xf32>
    %c1_57 = arith.constant 1 : index
    %c0_58 = arith.constant 0 : index
    %c0_59 = arith.constant 0 : index
    %85 = vector.load %arg11[%c1_57, %c0_58, %c0_59] : memref<2x1x32xf32, #tpu.memory_space<vmem>>, vector<1x1x32xf32>
    %86 = vector.shape_cast %85 : vector<1x1x32xf32> to vector<1x32xf32>
    %87 = vector.broadcast %86 : vector<1x32xf32> to vector<24x32xf32>
    %88 = arith.addf %84, %87 : vector<24x32xf32>
    %cst_60 = arith.constant 0.000000e+00 : f32
    %89 = vector.broadcast %cst_60 : f32 to vector<24x32xf32>
    %90 = arith.maximumf %88, %89 : vector<24x32xf32>
    %c1_61 = arith.constant 1 : index
    %c0_62 = arith.constant 0 : index
    %c0_63 = arith.constant 0 : index
    %91 = vector.load %arg12[%c1_61, %c0_62, %c0_63] : memref<2x32x32xf32, #tpu.memory_space<vmem>>, vector<1x32x32xf32>
    %92 = vector.shape_cast %91 : vector<1x32x32xf32> to vector<32x32xf32>
    %cst_64 = arith.constant dense<0.000000e+00> : vector<24x32xf32>
    %93 = tpu.matmul %90, %92, %cst_64 {dimension_numbers = #tpu.dot_dimension_numbers<[1], [0], [0], [1], [0, 0, 1, 1], [], []>} : vector<24x32xf32>, vector<32x32xf32>, vector<24x32xf32> -> vector<24x32xf32>
    %c1_65 = arith.constant 1 : index
    %c0_66 = arith.constant 0 : index
    %c0_67 = arith.constant 0 : index
    %94 = vector.load %arg13[%c1_65, %c0_66, %c0_67] : memref<2x1x32xf32, #tpu.memory_space<vmem>>, vector<1x1x32xf32>
    %95 = vector.shape_cast %94 : vector<1x1x32xf32> to vector<1x32xf32>
    %96 = vector.broadcast %95 : vector<1x32xf32> to vector<24x32xf32>
    %97 = arith.addf %93, %96 : vector<24x32xf32>
    %98 = tpu.iota {dimensions = array<i32: 0>} : vector<8x24xi32>
    %c0_68 = arith.constant 0 : index
    %c0_69 = arith.constant 0 : index
    %99 = vector.load %arg3[%c0_68, %c0_69] : memref<1x24xi32, #tpu.memory_space<vmem>>, vector<1x24xi32>
    %100 = vector.broadcast %99 : vector<1x24xi32> to vector<8x24xi32>
    %101 = arith.cmpi eq, %98, %100 : vector<8x24xi32>
    %102 = arith.extui %101 : vector<8x24xi1> to vector<8x24xi32>
    %103 = arith.sitofp %102 : vector<8x24xi32> to vector<8x24xf32>
    %cst_70 = arith.constant dense<0.000000e+00> : vector<8x32xf32>
    %104 = tpu.matmul %103, %97, %cst_70 {dimension_numbers = #tpu.dot_dimension_numbers<[1], [0], [0], [1], [0, 0, 1, 1], [], []>} : vector<8x24xf32>, vector<24x32xf32>, vector<8x32xf32> -> vector<8x32xf32>
    %c0_71 = arith.constant 0 : index
    %c0_72 = arith.constant 0 : index
    %105 = vector.load %arg14[%c0_71, %c0_72] : memref<32x128xf32, #tpu.memory_space<vmem>>, vector<32x128xf32>
    %cst_73 = arith.constant dense<0.000000e+00> : vector<8x128xf32>
    %106 = tpu.matmul %104, %105, %cst_73 {dimension_numbers = #tpu.dot_dimension_numbers<[1], [0], [0], [1], [0, 0, 1, 1], [], []>} : vector<8x32xf32>, vector<32x128xf32>, vector<8x128xf32> -> vector<8x128xf32>
    %c0_74 = arith.constant 0 : index
    %c0_75 = arith.constant 0 : index
    %107 = vector.load %arg15[%c0_74, %c0_75] : memref<1x128xf32, #tpu.memory_space<vmem>>, vector<1x128xf32>
    %108 = vector.broadcast %107 : vector<1x128xf32> to vector<8x128xf32>
    %109 = arith.addf %106, %108 : vector<8x128xf32>
    %c0_76 = arith.constant 0 : index
    %c0_77 = arith.constant 0 : index
    %110 = vector.load %arg16[%c0_76, %c0_77] : memref<8x128xf32, #tpu.memory_space<vmem>>, vector<8x128xf32>
    tpu.vector_store %arg16[%c0_76, %c0_77], %109 {strides = array<i32>} : memref<8x128xf32, #tpu.memory_space<vmem>>, vector<8x128xf32>,
    return
  }
}

</mosaic_0001>

<llo_original>
// kernel: net_forward.1
$region0: #{net_forward.1}
  #allocation0 [shape = 'u32[]', space=smem, size = 0x4, offset = 0x4, fixed_abs, tag = 'smem constant byte address 0x4 - core index']
  #allocation1 [shape = 'u32[144,128]{1,0:T(1,128)}', space=vmem, size = 0x12000, scoped, tag = 'internal scratch']
  %s0 = inlined_call_operand.vmem [shape: s32[24,2], index: 0, kind: input, shape index: {}]
  %s1 = inlined_call_operand.vmem [shape: s32[24,1], index: 1, kind: input, shape index: {}]
  %s2 = inlined_call_operand.vmem [shape: s32[2,48], index: 2, kind: input, shape index: {}]
  %s3 = inlined_call_operand.vmem [shape: s32[1,24], index: 3, kind: input, shape index: {}]
  %s4 = inlined_call_operand.vmem [shape: f32[48,2], index: 4, kind: input, shape index: {}]
  %s5 = inlined_call_operand.hbm [shape: f32[8,32], index: 5, kind: input, shape index: {}]
  %s6 = inlined_call_operand.vmem [shape: f32[16,32], index: 6, kind: input, shape index: {}]
  %s7 = inlined_call_operand.hbm [shape: f32[24,32], index: 7, kind: input, shape index: {}]
  %s8 = inlined_call_operand.vmem [shape: f32[2,2,32], index: 8, kind: input, shape index: {}]
  %s9 = inlined_call_operand.hbm [shape: f32[2,1,32], index: 9, kind: input, shape index: {}]
  %s10 = inlined_call_operand.vmem [shape: f32[2,32,32], index: 10, kind: input, shape index: {}]
  %s11 = inlined_call_operand.hbm [shape: f32[2,1,32], index: 11, kind: input, shape index: {}]
  %s12 = inlined_call_operand.hbm [shape: f32[2,32,32], index: 12, kind: input, shape index: {}]
  %s13 = inlined_call_operand.hbm [shape: f32[2,1,32], index: 13, kind: input, shape index: {}]
  %s14 = inlined_call_operand.vmem [shape: f32[32,128], index: 14, kind: input, shape index: {}]
  %s15 = inlined_call_operand.hbm [shape: f32[1,128], index: 15, kind: input, shape index: {}]
  %s16 = inlined_call_operand.vmem [shape: f32[8,128], index: 16, kind: output, shape index: {}]
  %s17 = sld [smem:[#allocation0]]
  $region102: #{net_forward.1} parent=0
    _
  %s19 = ssub.s32 1, %s17
  %s20 = scalar_select 0, %s19, %s17
  $region1: #{net_forward.1} parent=0
    #allocation2 [shape = 'u8[4096]{0}', space=vmem, size = 0x1000, scoped, tag = 'input window, operand 5, single buffered']
    #allocation3 [shape = 's32[1]{0}', space=sflag, size = 0x4, scoped, tag = 'scoped memory for net_forward.1']
    #allocation4 [shape = 'u8[12288]{0}', space=vmem, size = 0x3000, scoped, tag = 'input window, operand 7, single buffered']
    #allocation5 [shape = 's32[1]{0}', space=sflag, size = 0x4, scoped, tag = 'scoped memory for net_forward.1']
    #allocation6 [shape = 'u8[1024]{0}', space=vmem, size = 0x400, scoped, tag = 'input window, operand 9, single buffered']
    #allocation7 [shape = 'u8[1024]{0}', space=vmem, size = 0x400, scoped, tag = 'input window, operand 11, single buffered']
    #allocation8 [shape = 's32[1]{0}', space=sflag, size = 0x4, scoped, tag = 'scoped memory for net_forward.1']
    #allocation9 [shape = 'u8[32768]{0}', space=vmem, size = 0x8000, scoped, tag = 'input window, operand 12, single buffered']
    #allocation10 [shape = 'u8[1024]{0}', space=vmem, size = 0x400, scoped, tag = 'input window, operand 13, single buffered']
    #allocation11 [shape = 's32[1]{0}', space=sflag, size = 0x4, scoped, tag = 'scoped memory for net_forward.1']
    #allocation12 [shape = 'u8[512]{0}', space=vmem, size = 0x400, scoped, tag = 'input window, operand 15, single buffered']
    %21 = vsyncpa [#allocation3], 0
    %22 = vsyncpa [#allocation5], 0
    %23 = vsyncpa [#allocation8], 0
    %24 = vsyncpa [#allocation11], 0
    // Predicated region
    $region2: #{net_forward.1} parent=1 // pred_check
      _
    $region3: #{net_forward.1} parent=1 // pred_check_branch
      %26 = sbr.rel (0) target = $region5
    $region4: #{net_forward.1} parent=1 // pred_region
      _
    $region5: #{net_forward.1} parent=1 // pred_fallthru
      _
    // Predicated region
    $region6: #{net_forward.1} parent=1 // pred_check
      _
    $region7: #{net_forward.1} parent=1 // pred_check_branch
      %28 = sbr.rel (0) target = $region9
    $region8: #{net_forward.1} parent=1 // pred_region
      _
    $region9: #{net_forward.1} parent=1 // pred_fallthru
      _
    // Predicated region
    $region10: #{net_forward.1} parent=1 // pred_check
      _
    $region11: #{net_forward.1} parent=1 // pred_check_branch
      %30 = sbr.rel (0) target = $region13
    $region12: #{net_forward.1} parent=1 // pred_region
      _
    $region13: #{net_forward.1} parent=1 // pred_fallthru
      _
    // Predicated region
    $region14: #{net_forward.1} parent=1 // pred_check
      _
    $region15: #{net_forward.1} parent=1 // pred_check_branch
      %32 = sbr.rel (0) target = $region17
    $region16: #{net_forward.1} parent=1 // pred_region
      _
    $region17: #{net_forward.1} parent=1 // pred_fallthru
      _
    // Predicated region
    $region18: #{net_forward.1} parent=1 // pred_check
      _
    $region19: #{net_forward.1} parent=1 // pred_check_branch
      %34 = sbr.rel (0) target = $region21
    $region20: #{net_forward.1} parent=1 // pred_region
      _
    $region21: #{net_forward.1} parent=1 // pred_fallthru
      _
    // Predicated region
    $region22: #{net_forward.1} parent=1 // pred_check
      _
    $region23: #{net_forward.1} parent=1 // pred_check_branch
      %36 = sbr.rel (0) target = $region25
    $region24: #{net_forward.1} parent=1 // pred_region
      %s38 = ssub.s32 128, 128
      %39 = vsyncadd [#allocation3], %s38
      %s41 = sshll.u32 [#allocation2], 4
      %s42 = int_to_ptr.vmem [resolvable:$true] %s41
      %44 = dma.hbm_to_vmem [thread:$0]  %s5, 128, %s42, [#allocation3]
    $region25: #{net_forward.1} parent=1 // pred_fallthru
      _
    // Predicated region
    $region26: #{net_forward.1} parent=1 // pred_check
      _
    $region27: #{net_forward.1} parent=1 // pred_check_branch
      %46 = sbr.rel (0) target = $region29
    $region28: #{net_forward.1} parent=1 // pred_region
      _
    $region29: #{net_forward.1} parent=1 // pred_fallthru
      _
    // Predicated region
    $region30: #{net_forward.1} parent=1 // pred_check
      _
    $region31: #{net_forward.1} parent=1 // pred_check_branch
      %48 = sbr.rel (0) target = $region33
    $region32: #{net_forward.1} parent=1 // pred_region
      %s50 = ssub.s32 384, 384
      %51 = vsyncadd [#allocation5], %s50
      %s52 = sshll.u32 [#allocation4], 4
      %s53 = int_to_ptr.vmem [resolvable:$true] %s52
      %58 = dma.hbm_to_vmem [thread:$0]  %s7, 384, %s53, [#allocation5], 128, 128, 8
    $region33: #{net_forward.1} parent=1 // pred_fallthru
      _
    // Predicated region
    $region34: #{net_forward.1} parent=1 // pred_check
      _
    $region35: #{net_forward.1} parent=1 // pred_check_branch
      %60 = sbr.rel (0) target = $region37
    $region36: #{net_forward.1} parent=1 // pred_region
      _
    $region37: #{net_forward.1} parent=1 // pred_fallthru
      _
    // Predicated region
    $region38: #{net_forward.1} parent=1 // pred_check
      _
    $region39: #{net_forward.1} parent=1 // pred_check_branch
      %62 = sbr.rel (0) target = $region41
    $region40: #{net_forward.1} parent=1 // pred_region
      %s64 = ssub.s32 32, 32
      %65 = vsyncadd [#allocation5], %s64
      %s66 = sshll.u32 [#allocation6], 4
      %s67 = int_to_ptr.vmem [resolvable:$true] %s66
      %72 = dma.hbm_to_vmem [thread:$0]  %s9, 32, %s67, [#allocation5], 16, 16, 1
    $region41: #{net_forward.1} parent=1 // pred_fallthru
      _
    // Predicated region
    $region42: #{net_forward.1} parent=1 // pred_check
      _
    $region43: #{net_forward.1} parent=1 // pred_check_branch
      %74 = sbr.rel (0) target = $region45
    $region44: #{net_forward.1} parent=1 // pred_region
      _
    $region45: #{net_forward.1} parent=1 // pred_fallthru
      _
    // Predicated region
    $region46: #{net_forward.1} parent=1 // pred_check
      _
    $region47: #{net_forward.1} parent=1 // pred_check_branch
      %76 = sbr.rel (0) target = $region49
    $region48: #{net_forward.1} parent=1 // pred_region
      %s78 = ssub.s32 32, 32
      %79 = vsyncadd [#allocation8], %s78
      %s80 = sshll.u32 [#allocation7], 4
      %s81 = int_to_ptr.vmem [resolvable:$true] %s80
      %86 = dma.hbm_to_vmem [thread:$0]  %s11, 32, %s81, [#allocation8], 16, 16, 1
    $region49: #{net_forward.1} parent=1 // pred_fallthru
      _
    // Predicated region
    $region50: #{net_forward.1} parent=1 // pred_check
      _
    $region51: #{net_forward.1} parent=1 // pred_check_branch
      %88 = sbr.rel (0) target = $region53
    $region52: #{net_forward.1} parent=1 // pred_region
      %s90 = ssub.s32 1024, 1024
      %91 = vsyncadd [#allocation8], %s90
      %s92 = sshll.u32 [#allocation9], 4
      %s93 = int_to_ptr.vmem [resolvable:$true] %s92
      %98 = dma.hbm_to_vmem [thread:$0]  %s12, 1024, %s93, [#allocation8], 128, 128, 8
    $region53: #{net_forward.1} parent=1 // pred_fallthru
      _
    // Predicated region
    $region54: #{net_forward.1} parent=1 // pred_check
      _
    $region55: #{net_forward.1} parent=1 // pred_check_branch
      %100 = sbr.rel (0) target = $region57
    $region56: #{net_forward.1} parent=1 // pred_region
      %s102 = ssub.s32 32, 32
      %103 = vsyncadd [#allocation11], %s102
      %s104 = sshll.u32 [#allocation10], 4
      %s105 = int_to_ptr.vmem [resolvable:$true] %s104
      %110 = dma.hbm_to_vmem [thread:$0]  %s13, 32, %s105, [#allocation11], 16, 16, 1
    $region57: #{net_forward.1} parent=1 // pred_fallthru
      _
    // Predicated region
    $region58: #{net_forward.1} parent=1 // pred_check
      _
    $region59: #{net_forward.1} parent=1 // pred_check_branch
      %112 = sbr.rel (0) target = $region61
    $region60: #{net_forward.1} parent=1 // pred_region
      _
    $region61: #{net_forward.1} parent=1 // pred_fallthru
      _
    // Predicated region
    $region62: #{net_forward.1} parent=1 // pred_check
      _
    $region63: #{net_forward.1} parent=1 // pred_check_branch
      %114 = sbr.rel (0) target = $region65
    $region64: #{net_forward.1} parent=1 // pred_region
      %s116 = ssub.s32 16, 16
      %117 = vsyncadd [#allocation11], %s116
      %s119 = sshll.u32 [#allocation12], 4
      %s120 = int_to_ptr.vmem [resolvable:$true] %s119
      %122 = dma.hbm_to_vmem [thread:$0]  %s15, 16, %s120, [#allocation11]
    $region65: #{net_forward.1} parent=1 // pred_fallthru
      _
    // Predicated region
    $region66: #{net_forward.1} parent=1 // pred_check
      _
    $region67: #{net_forward.1} parent=1 // pred_check_branch
      %124 = sbr.rel (0) target = $region69
    $region68: #{net_forward.1} parent=1 // pred_region
      %125 = dma.done [#allocation3], 128
    $region69: #{net_forward.1} parent=1 // pred_fallthru
      _
    // Predicated region
    $region70: #{net_forward.1} parent=1 // pred_check
      _
    $region71: #{net_forward.1} parent=1 // pred_check_branch
      %127 = sbr.rel (0) target = $region73
    $region72: #{net_forward.1} parent=1 // pred_region
      %128 = dma.done [#allocation5], 384
    $region73: #{net_forward.1} parent=1 // pred_fallthru
      _
    // Predicated region
    $region74: #{net_forward.1} parent=1 // pred_check
      _
    $region75: #{net_forward.1} parent=1 // pred_check_branch
      %130 = sbr.rel (0) target = $region77
    $region76: #{net_forward.1} parent=1 // pred_region
      %131 = dma.done [#allocation5], 32
    $region77: #{net_forward.1} parent=1 // pred_fallthru
      _
    // Predicated region
    $region78: #{net_forward.1} parent=1 // pred_check
      _
    $region79: #{net_forward.1} parent=1 // pred_check_branch
      %133 = sbr.rel (0) target = $region81
    $region80: #{net_forward.1} parent=1 // pred_region
      %134 = dma.done [#allocation8], 32
    $region81: #{net_forward.1} parent=1 // pred_fallthru
      _
    // Predicated region
    $region82: #{net_forward.1} parent=1 // pred_check
      _
    $region83: #{net_forward.1} parent=1 // pred_check_branch
      %136 = sbr.rel (0) target = $region85
    $region84: #{net_forward.1} parent=1 // pred_region
      %137 = dma.done [#allocation8], 1024
    $region85: #{net_forward.1} parent=1 // pred_fallthru
      _
    // Predicated region
    $region86: #{net_forward.1} parent=1 // pred_check
      _
    $region87: #{net_forward.1} parent=1 // pred_check_branch
      %139 = sbr.rel (0) target = $region89
    $region88: #{net_forward.1} parent=1 // pred_region
      %140 = dma.done [#allocation11], 32
    $region89: #{net_forward.1} parent=1 // pred_fallthru
      _
    // Predicated region
    $region90: #{net_forward.1} parent=1 // pred_check
      _
    $region91: #{net_forward.1} parent=1 // pred_check_branch
      %142 = sbr.rel (0) target = $region93
    $region92: #{net_forward.1} parent=1 // pred_region
      %143 = dma.done [#allocation11], 16
    $region93: #{net_forward.1} parent=1 // pred_fallthru
      _
    %v144 = vld [vmem:[%s0] sm:$0xff]
    %v145 = vld [vmem:[%s0 + $0x8] sm:$0xff]
    %v146 = vld [vmem:[%s0 + $0x10] sm:$0xff]
    %v147 = vld [vmem:[%s1] sm:$0xff]
    %v148 = vld [vmem:[%s1 + $0x8] sm:$0xff]
    %v149 = vld [vmem:[%s1 + $0x10] sm:$0xff]
    %vm150 = vcmp.lt.s32.totalorder %v147, 20
    %v151 = vsel %vm150, %v147, 20
    %vm152 = vcmp.lt.s32.totalorder %v148, 20
    %v153 = vsel %vm152, %v148, 20
    %vm154 = vcmp.lt.s32.totalorder %v149, 20
    %v155 = vsel %vm154, %v149, 20
    %v156 = vlaneseq
    %v157 = vand.u32 %v156, 127
    %158 = vset.pattern.permute.xlu0 0
    %159 = vperm.xlu0 %158, %v144
    %v160 = vpop.permute.xlu0 %159
    %161 = vset.pattern.permute.xlu0 0
    %162 = vperm.xlu0 %161, %v145
    %v163 = vpop.permute.xlu0 %162
    %164 = vset.pattern.permute.xlu0 0
    %165 = vperm.xlu0 %164, %v146
    %v166 = vpop.permute.xlu0 %165
    %vm167 = vcmp.eq.s32.totalorder %v157, %v160
    %vm168 = vcmp.eq.s32.totalorder %v157, %v163
    %vm169 = vcmp.eq.s32.totalorder %v157, %v166
    %v170 = vsel %vm167, 1, 0
    %v171 = vsel %vm168, 1, 0
    %v172 = vsel %vm169, 1, 0
    %v173 = vcvt.s32.f32 %v170
    %v174 = vcvt.s32.f32 %v171
    %v175 = vcvt.s32.f32 %v172
    %v176 = vld [vmem:[#allocation2] sm:$0xff]
    %177 = vset.pattern.permute.xlu0 1
    %178 = vperm.xlu0 %177, %v144
    %v179 = vpop.permute.xlu0 %178
    %180 = vset.pattern.permute.xlu0 1
    %181 = vperm.xlu0 %180, %v145
    %v182 = vpop.permute.xlu0 %181
    %183 = vset.pattern.permute.xlu0 1
    %184 = vperm.xlu0 %183, %v146
    %v185 = vpop.permute.xlu0 %184
    %vm186 = vcmp.eq.s32.totalorder %v157, %v179
    %vm187 = vcmp.eq.s32.totalorder %v157, %v182
    %vm188 = vcmp.eq.s32.totalorder %v157, %v185
    %v189 = vsel %vm186, 1, 0
    %v190 = vsel %vm187, 1, 0
    %v191 = vsel %vm188, 1, 0
    %v192 = vcvt.s32.f32 %v189
    %v193 = vcvt.s32.f32 %v190
    %v194 = vcvt.s32.f32 %v191
    %v195 = vld [vmem:[%s6] sm:$0xff]
    %v196 = vld [vmem:[%s6 + $0x8] sm:$0xff]
    %vm197 = vcmask 130048
    %v199 = vsel %vm197, %v192, 0
    %v202 = vsel %vm197, %v193, 0
    %v205 = vsel %vm197, %v194, 0
    %207 = vmatprep.subr.mxu0 0.0
    %208 = vmatpush1.msra.mxu0 0.0
    %209 = vmatprep.subr.mxu0 0.0
    %210 = vmatpush1.msra.mxu0 0.0
    %211 = vmatprep.subr.mxu0 0.0
    %212 = vmatpush1.msra.mxu0 0.0
    %213 = vmatprep.subr.mxu0 0.0
    %214 = vmatpush1.msra.mxu0 0.0
    %215 = vmatprep.subr.mxu0 0.0
    %216 = vmatpush1.msra.mxu0 0.0
    %217 = vmatprep.subr.mxu0 0.0
    %218 = vmatpush1.msra.mxu0 0.0
    %219 = vmatprep.subr.mxu0 0.0
    %220 = vmatpush1.msra.mxu0 0.0
    %221 = vmatprep.subr.mxu0 0.0
    %222 = vmatpush1.msra.mxu0 0.0
    %223 = vmatprep.subr.mxu0 0.0
    %224 = vmatpush1.msra.mxu0 0.0
    %225 = vmatprep.subr.mxu0 0.0
    %226 = vmatpush1.msra.mxu0 0.0
    %227 = vmatprep.subr.mxu0 0.0
    %228 = vmatpush1.msra.mxu0 0.0
    %229 = vmatprep.subr.mxu0 0.0
    %230 = vmatpush1.msra.mxu0 0.0
    %231 = vmatprep.subr.mxu0 0.0
    %232 = vmatpush1.msra.mxu0 0.0
    %233 = vmatprep.subr.mxu0 0.0
    %234 = vmatpush1.msra.mxu0 0.0
    %235 = vmatprep.subr.mxu0 0.0
    %236 = vmatpush1.msra.mxu0 %v196
    %237 = vmatprep.subr.mxu0 0.0
    %238 = vmatpush1.msra.mxu0 %v195
    %239 = vmatprep.subr.mxu0 0.0
    %240 = vmatpush2.msra.mxu0 0.0
    %241 = vmatprep.subr.mxu0 0.0
    %242 = vmatpush2.msra.mxu0 0.0
    %243 = vmatprep.subr.mxu0 0.0
    %244 = vmatpush2.msra.mxu0 0.0
    %245 = vmatprep.subr.mxu0 0.0
    %246 = vmatpush2.msra.mxu0 0.0
    %247 = vmatprep.subr.mxu0 0.0
    %248 = vmatpush2.msra.mxu0 0.0
    %249 = vmatprep.subr.mxu0 0.0
    %250 = vmatpush2.msra.mxu0 0.0
    %251 = vmatprep.subr.mxu0 0.0
    %252 = vmatpush2.msra.mxu0 0.0
    %253 = vmatprep.subr.mxu0 0.0
    %254 = vmatpush2.msra.mxu0 0.0
    %255 = vmatprep.subr.mxu0 0.0
    %256 = vmatpush2.msra.mxu0 0.0
    %257 = vmatprep.subr.mxu0 0.0
    %258 = vmatpush2.msra.mxu0 0.0
    %259 = vmatprep.subr.mxu0 0.0
    %260 = vmatpush2.msra.mxu0 0.0
    %261 = vmatprep.subr.mxu0 0.0
    %262 = vmatpush2.msra.mxu0 0.0
    %263 = vmatprep.subr.mxu0 0.0
    %264 = vmatpush2.msra.mxu0 0.0
    %265 = vmatprep.subr.mxu0 0.0
    %266 = vmatpush2.msra.mxu0 0.0
    %267 = vmatprep.subr.mxu0 0.0
    %268 = vmatpush2.msra.mxu0 0.0
    %269 = vmatprep.subr.mxu0 0.0
    %270 = vmatpush2.msra.mxu0 0.0
    %271 = vmatprep.mubr.f32.mxu0 0.0
    %272 = vmatmul.mubr.f32.gmra.mxu0 %v199
    %v273 = vpop.f32.mrf.mxu0
    %v274 = vadd.f32 0.0, %v273
    %v275 = vpop.f32.mrf.mxu0
    %276 = vmatprep.mubr.f32.mxu0 0.0
    %277 = vmatmul.mubr.f32.gmra.mxu0 %v202
    %v278 = vpop.f32.mrf.mxu0
    %v279 = vadd.f32 0.0, %v278
    %v280 = vpop.f32.mrf.mxu0
    %281 = vmatprep.mubr.f32.mxu0 0.0
    %282 = vmatmul.mubr.f32.gmra.mxu0 %v205
    %v283 = vpop.f32.mrf.mxu0
    %v284 = vadd.f32 0.0, %v283
    %v285 = vpop.f32.mrf.mxu0
    %286 = vdwg.mxu0
    %vm287 = vcmask 64512
    %v289 = vsel %vm287, %v173, 0
    %v292 = vsel %vm287, %v174, 0
    %v295 = vsel %vm287, %v175, 0
    %297 = vmatprep.subr.mxu0 0.0
    %298 = vmatpush1.msra.mxu0 0.0
    %299 = vmatprep.subr.mxu0 0.0
    %300 = vmatpush1.msra.mxu0 0.0
    %301 = vmatprep.subr.mxu0 0.0
    %302 = vmatpush1.msra.mxu0 0.0
    %303 = vmatprep.subr.mxu0 0.0
    %304 = vmatpush1.msra.mxu0 0.0
    %305 = vmatprep.subr.mxu0 0.0
    %306 = vmatpush1.msra.mxu0 0.0
    %307 = vmatprep.subr.mxu0 0.0
    %308 = vmatpush1.msra.mxu0 0.0
    %309 = vmatprep.subr.mxu0 0.0
    %310 = vmatpush1.msra.mxu0 0.0
    %311 = vmatprep.subr.mxu0 0.0
    %312 = vmatpush1.msra.mxu0 0.0
    %313 = vmatprep.subr.mxu0 0.0
    %314 = vmatpush1.msra.mxu0 0.0
    %315 = vmatprep.subr.mxu0 0.0
    %316 = vmatpush1.msra.mxu0 0.0
    %317 = vmatprep.subr.mxu0 0.0
    %318 = vmatpush1.msra.mxu0 0.0
    %319 = vmatprep.subr.mxu0 0.0
    %320 = vmatpush1.msra.mxu0 0.0
    %321 = vmatprep.subr.mxu0 0.0
    %322 = vmatpush1.msra.mxu0 0.0
    %323 = vmatprep.subr.mxu0 0.0
    %324 = vmatpush1.msra.mxu0 0.0
    %325 = vmatprep.subr.mxu0 0.0
    %326 = vmatpush1.msra.mxu0 0.0
    %327 = vmatprep.subr.mxu0 0.0
    %328 = vmatpush1.msra.mxu0 %v176
    %329 = vmatprep.subr.mxu0 0.0
    %330 = vmatpush2.msra.mxu0 0.0
    %331 = vmatprep.subr.mxu0 0.0
    %332 = vmatpush2.msra.mxu0 0.0
    %333 = vmatprep.subr.mxu0 0.0
    %334 = vmatpush2.msra.mxu0 0.0
    %335 = vmatprep.subr.mxu0 0.0
    %336 = vmatpush2.msra.mxu0 0.0
    %337 = vmatprep.subr.mxu0 0.0
    %338 = vmatpush2.msra.mxu0 0.0
    %339 = vmatprep.subr.mxu0 0.0
    %340 = vmatpush2.msra.mxu0 0.0
    %341 = vmatprep.subr.mxu0 0.0
    %342 = vmatpush2.msra.mxu0 0.0
    %343 = vmatprep.subr.mxu0 0.0
    %344 = vmatpush2.msra.mxu0 0.0
    %345 = vmatprep.subr.mxu0 0.0
    %346 = vmatpush2.msra.mxu0 0.0
    %347 = vmatprep.subr.mxu0 0.0
    %348 = vmatpush2.msra.mxu0 0.0
    %349 = vmatprep.subr.mxu0 0.0
    %350 = vmatpush2.msra.mxu0 0.0
    %351 = vmatprep.subr.mxu0 0.0
    %352 = vmatpush2.msra.mxu0 0.0
    %353 = vmatprep.subr.mxu0 0.0
    %354 = vmatpush2.msra.mxu0 0.0
    %355 = vmatprep.subr.mxu0 0.0
    %356 = vmatpush2.msra.mxu0 0.0
    %357 = vmatprep.subr.mxu0 0.0
    %358 = vmatpush2.msra.mxu0 0.0
    %359 = vmatprep.subr.mxu0 0.0
    %360 = vmatpush2.msra.mxu0 0.0
    %361 = vmatprep.mubr.f32.mxu0 0.0
    %362 = vmatmul.mubr.f32.gmra.mxu0 %v289
    %v363 = vpop.f32.mrf.mxu0
    %v364 = vadd.f32 %v274, %v363
    %v365 = vpop.f32.mrf.mxu0
    %366 = vmatprep.mubr.f32.mxu0 0.0
    %367 = vmatmul.mubr.f32.gmra.mxu0 %v292
    %v368 = vpop.f32.mrf.mxu0
    %v369 = vadd.f32 %v279, %v368
    %v370 = vpop.f32.mrf.mxu0
    %371 = vmatprep.mubr.f32.mxu0 0.0
    %372 = vmatmul.mubr.f32.gmra.mxu0 %v295
    %v373 = vpop.f32.mrf.mxu0
    %v374 = vadd.f32 %v284, %v373
    %v375 = vpop.f32.mrf.mxu0
    %376 = vdwg.mxu0
    %377 = vset.pattern.permute.xlu0 0
    %378 = vperm.xlu0 %377, %v151
    %v379 = vpop.permute.xlu0 %378
    %380 = vset.pattern.permute.xlu0 0
    %381 = vperm.xlu0 %380, %v153
    %v382 = vpop.permute.xlu0 %381
    %383 = vset.pattern.permute.xlu0 0
    %384 = vperm.xlu0 %383, %v155
    %v385 = vpop.permute.xlu0 %384
    %vm386 = vcmp.eq.s32.totalorder %v157, %v379
    %vm387 = vcmp.eq.s32.totalorder %v157, %v382
    %vm388 = vcmp.eq.s32.totalorder %v157, %v385
    %v389 = vsel %vm386, 1, 0
    %v390 = vsel %vm387, 1, 0
    %v391 = vsel %vm388, 1, 0
    %v392 = vcvt.s32.f32 %v389
    %v393 = vcvt.s32.f32 %v390
    %v394 = vcvt.s32.f32 %v391
    %v395 = vld [vmem:[#allocation4] sm:$0xff]
    %v396 = vld [vmem:[#allocation4 + $0x8] sm:$0xff]
    %v397 = vld [vmem:[#allocation4 + $0x10] sm:$0xff]
    %vm398 = vcmask 195584
    %v400 = vsel %vm398, %v392, 0
    %v403 = vsel %vm398, %v393, 0
    %v406 = vsel %vm398, %v394, 0
    %408 = vmatprep.subr.mxu0 0.0
    %409 = vmatpush1.msra.mxu0 0.0
    %410 = vmatprep.subr.mxu0 0.0
    %411 = vmatpush1.msra.mxu0 0.0
    %412 = vmatprep.subr.mxu0 0.0
    %413 = vmatpush1.msra.mxu0 0.0
    %414 = vmatprep.subr.mxu0 0.0
    %415 = vmatpush1.msra.mxu0 0.0
    %416 = vmatprep.subr.mxu0 0.0
    %417 = vmatpush1.msra.mxu0 0.0
    %418 = vmatprep.subr.mxu0 0.0
    %419 = vmatpush1.msra.mxu0 0.0
    %420 = vmatprep.subr.mxu0 0.0
    %421 = vmatpush1.msra.mxu0 0.0
    %422 = vmatprep.subr.mxu0 0.0
    %423 = vmatpush1.msra.mxu0 0.0
    %424 = vmatprep.subr.mxu0 0.0
    %425 = vmatpush1.msra.mxu0 0.0
    %426 = vmatprep.subr.mxu0 0.0
    %427 = vmatpush1.msra.mxu0 0.0
    %428 = vmatprep.subr.mxu0 0.0
    %429 = vmatpush1.msra.mxu0 0.0
    %430 = vmatprep.subr.mxu0 0.0
    %431 = vmatpush1.msra.mxu0 0.0
    %432 = vmatprep.subr.mxu0 0.0
    %433 = vmatpush1.msra.mxu0 0.0
    %434 = vmatprep.subr.mxu0 0.0
    %435 = vmatpush1.msra.mxu0 %v397
    %436 = vmatprep.subr.mxu0 0.0
    %437 = vmatpush1.msra.mxu0 %v396
    %438 = vmatprep.subr.mxu0 0.0
    %439 = vmatpush1.msra.mxu0 %v395
    %440 = vmatprep.subr.mxu0 0.0
    %441 = vmatpush2.msra.mxu0 0.0
    %442 = vmatprep.subr.mxu0 0.0
    %443 = vmatpush2.msra.mxu0 0.0
    %444 = vmatprep.subr.mxu0 0.0
    %445 = vmatpush2.msra.mxu0 0.0
    %446 = vmatprep.subr.mxu0 0.0
    %447 = vmatpush2.msra.mxu0 0.0
    %448 = vmatprep.subr.mxu0 0.0
    %449 = vmatpush2.msra.mxu0 0.0
    %450 = vmatprep.subr.mxu0 0.0
    %451 = vmatpush2.msra.mxu0 0.0
    %452 = vmatprep.subr.mxu0 0.0
    %453 = vmatpush2.msra.mxu0 0.0
    %454 = vmatprep.subr.mxu0 0.0
    %455 = vmatpush2.msra.mxu0 0.0
    %456 = vmatprep.subr.mxu0 0.0
    %457 = vmatpush2.msra.mxu0 0.0
    %458 = vmatprep.subr.mxu0 0.0
    %459 = vmatpush2.msra.mxu0 0.0
    %460 = vmatprep.subr.mxu0 0.0
    %461 = vmatpush2.msra.mxu0 0.0
    %462 = vmatprep.subr.mxu0 0.0
    %463 = vmatpush2.msra.mxu0 0.0
    %464 = vmatprep.subr.mxu0 0.0
    %465 = vmatpush2.msra.mxu0 0.0
    %466 = vmatprep.subr.mxu0 0.0
    %467 = vmatpush2.msra.mxu0 0.0
    %468 = vmatprep.subr.mxu0 0.0
    %469 = vmatpush2.msra.mxu0 0.0
    %470 = vmatprep.subr.mxu0 0.0
    %471 = vmatpush2.msra.mxu0 0.0
    %472 = vmatprep.mubr.f32.mxu0 0.0
    %473 = vmatmul.mubr.f32.gmra.mxu0 %v400
    %v474 = vpop.f32.mrf.mxu0
    %v475 = vadd.f32 0.0, %v474
    %v476 = vpop.f32.mrf.mxu0
    %477 = vmatprep.mubr.f32.mxu0 0.0
    %478 = vmatmul.mubr.f32.gmra.mxu0 %v403
    %v479 = vpop.f32.mrf.mxu0
    %v480 = vadd.f32 0.0, %v479
    %v481 = vpop.f32.mrf.mxu0
    %482 = vmatprep.mubr.f32.mxu0 0.0
    %483 = vmatmul.mubr.f32.gmra.mxu0 %v406
    %v484 = vpop.f32.mrf.mxu0
    %v485 = vadd.f32 0.0, %v484
    %v486 = vpop.f32.mrf.mxu0
    %487 = vdwg.mxu0
    %v488 = vadd.f32 %v364, %v475
    %v489 = vadd.f32 %v369, %v480
    %v490 = vadd.f32 %v374, %v485
    %v491 = vld [vmem:[%s2] sm:$0x1]
    %v492 = vld [vmem:[%s2 + $0x1] sm:$0x1]
    %v493 = vlaneseq
    %v494 = vshrl.u32 %v493, 7
    %v495 = vadd.s32 %v494, 8
    %v496 = vadd.s32 %v494, 16
    %v497 = vlaneseq
    %v498 = vshrl.u32 %v497, 7
    %v499 = vsub.s32 0, %v498
    %v500 = vrot.slane %v491, %v499
    %vm501 = vcmp.eq.s32.totalorder %v494, %v500
    %vm502 = vcmp.eq.s32.totalorder %v495, %v500
    %vm503 = vcmp.eq.s32.totalorder %v496, %v500
    %v504 = vsel %vm501, 1, 0
    %v505 = vsel %vm502, 1, 0
    %v506 = vsel %vm503, 1, 0
    %v507 = vcvt.s32.f32 %v504
    %v508 = vcvt.s32.f32 %v505
    %v509 = vcvt.s32.f32 %v506
    %v510 = vlaneseq
    %v511 = vshrl.u32 %v510, 7
    %v512 = vsub.s32 0, %v511
    %v513 = vrot.slane %v492, %v512
    %vm514 = vcmp.eq.s32.totalorder %v494, %v513
    %vm515 = vcmp.eq.s32.totalorder %v495, %v513
    %vm516 = vcmp.eq.s32.totalorder %v496, %v513
    %v517 = vsel %vm514, 1, 0
    %v518 = vsel %vm515, 1, 0
    %v519 = vsel %vm516, 1, 0
    %v520 = vcvt.s32.f32 %v517
    %v521 = vcvt.s32.f32 %v518
    %v522 = vcvt.s32.f32 %v519
    %v523 = vld [vmem:[%s4] sm:$0xff]
    %v524 = vld [vmem:[%s4 + $0x8] sm:$0xff]
    %v525 = vld [vmem:[%s4 + $0x10] sm:$0xff]
    %v526 = vld [vmem:[%s4 + $0x18] sm:$0xff]
    %v527 = vld [vmem:[%s4 + $0x20] sm:$0xff]
    %v528 = vld [vmem:[%s4 + $0x28] sm:$0xff]
    %v529 = vld [vmem:[%s8] sm:$0x3]
    %v530 = vld [vmem:[#allocation6] sm:$0x1]
    %v532 = vlaneseq
    %v533 = vshrl.u32 %v532, 7
    %v534 = vsub.s32 0, %v533
    %v535 = vrot.slane %v530, %v534
    %vm537 = vcmask 15360
    %v539 = vsel %vm537, %v523, 0
    %v542 = vsel %vm537, %v524, 0
    %v545 = vsel %vm537, %v525, 0
    %v548 = vsel %vm537, %v526, 0
    %v551 = vsel %vm537, %v527, 0
    %v554 = vsel %vm537, %v528, 0
    %vm556 = vcmask 1041408
    %v558 = vsel %vm556, %v529, 0
    %560 = vmatprep.subr.mxu0 0.0
    %561 = vmatpush1.msra.mxu0 0.0
    %562 = vmatprep.subr.mxu0 0.0
    %563 = vmatpush1.msra.mxu0 0.0
    %564 = vmatprep.subr.mxu0 0.0
    %565 = vmatpush1.msra.mxu0 0.0
    %566 = vmatprep.subr.mxu0 0.0
    %567 = vmatpush1.msra.mxu0 0.0
    %568 = vmatprep.subr.mxu0 0.0
    %569 = vmatpush1.msra.mxu0 0.0
    %570 = vmatprep.subr.mxu0 0.0
    %571 = vmatpush1.msra.mxu0 0.0
    %572 = vmatprep.subr.mxu0 0.0
    %573 = vmatpush1.msra.mxu0 0.0
    %574 = vmatprep.subr.mxu0 0.0
    %575 = vmatpush1.msra.mxu0 0.0
    %576 = vmatprep.subr.mxu0 0.0
    %577 = vmatpush1.msra.mxu0 0.0
    %578 = vmatprep.subr.mxu0 0.0
    %579 = vmatpush1.msra.mxu0 0.0
    %580 = vmatprep.subr.mxu0 0.0
    %581 = vmatpush1.msra.mxu0 0.0
    %582 = vmatprep.subr.mxu0 0.0
    %583 = vmatpush1.msra.mxu0 0.0
    %584 = vmatprep.subr.mxu0 0.0
    %585 = vmatpush1.msra.mxu0 0.0
    %586 = vmatprep.subr.mxu0 0.0
    %587 = vmatpush1.msra.mxu0 0.0
    %588 = vmatprep.subr.mxu0 0.0
    %589 = vmatpush1.msra.mxu0 0.0
    %590 = vmatprep.subr.mxu0 0.0
    %591 = vmatpush1.msra.mxu0 %v558
    %592 = vmatprep.subr.mxu0 0.0
    %593 = vmatpush2.msra.mxu0 0.0
    %594 = vmatprep.subr.mxu0 0.0
    %595 = vmatpush2.msra.mxu0 0.0
    %596 = vmatprep.subr.mxu0 0.0
    %597 = vmatpush2.msra.mxu0 0.0
    %598 = vmatprep.subr.mxu0 0.0
    %599 = vmatpush2.msra.mxu0 0.0
    %600 = vmatprep.subr.mxu0 0.0
    %601 = vmatpush2.msra.mxu0 0.0
    %602 = vmatprep.subr.mxu0 0.0
    %603 = vmatpush2.msra.mxu0 0.0
    %604 = vmatprep.subr.mxu0 0.0
    %605 = vmatpush2.msra.mxu0 0.0
    %606 = vmatprep.subr.mxu0 0.0
    %607 = vmatpush2.msra.mxu0 0.0
    %608 = vmatprep.subr.mxu0 0.0
    %609 = vmatpush2.msra.mxu0 0.0
    %610 = vmatprep.subr.mxu0 0.0
    %611 = vmatpush2.msra.mxu0 0.0
    %612 = vmatprep.subr.mxu0 0.0
    %613 = vmatpush2.msra.mxu0 0.0
    %614 = vmatprep.subr.mxu0 0.0
    %615 = vmatpush2.msra.mxu0 0.0
    %616 = vmatprep.subr.mxu0 0.0
    %617 = vmatpush2.msra.mxu0 0.0
    %618 = vmatprep.subr.mxu0 0.0
    %619 = vmatpush2.msra.mxu0 0.0
    %620 = vmatprep.subr.mxu0 0.0
    %621 = vmatpush2.msra.mxu0 0.0
    %622 = vmatprep.subr.mxu0 0.0
    %623 = vmatpush2.msra.mxu0 0.0
    %624 = vmatprep.mubr.f32.mxu0 0.0
    %625 = vmatmul.mubr.f32.gmra.mxu0 %v539
    %v626 = vpop.f32.mrf.mxu0
    %v627 = vadd.f32 %v535, %v626
    %v628 = vpop.f32.mrf.mxu0
    %629 = vmatprep.mubr.f32.mxu0 0.0
    %630 = vmatmul.mubr.f32.gmra.mxu0 %v542
    %v631 = vpop.f32.mrf.mxu0
    %v632 = vadd.f32 %v535, %v631
    %v633 = vpop.f32.mrf.mxu0
    %634 = vmatprep.mubr.f32.mxu0 0.0
    %635 = vmatmul.mubr.f32.gmra.mxu0 %v545
    %v636 = vpop.f32.mrf.mxu0
    %v637 = vadd.f32 %v535, %v636
    %v638 = vpop.f32.mrf.mxu0
    %639 = vmatprep.mubr.f32.mxu0 0.0
    %640 = vmatmul.mubr.f32.gmra.mxu0 %v548
    %v641 = vpop.f32.mrf.mxu0
    %v642 = vadd.f32 %v535, %v641
    %v643 = vpop.f32.mrf.mxu0
    %644 = vmatprep.mubr.f32.mxu0 0.0
    %645 = vmatmul.mubr.f32.gmra.mxu0 %v551
    %v646 = vpop.f32.mrf.mxu0
    %v647 = vadd.f32 %v535, %v646
    %v648 = vpop.f32.mrf.mxu0
    %649 = vmatprep.mubr.f32.mxu0 0.0
    %650 = vmatmul.mubr.f32.gmra.mxu0 %v554
    %v651 = vpop.f32.mrf.mxu0
    %v652 = vadd.f32 %v535, %v651
    %v653 = vpop.f32.mrf.mxu0
    %654 = vdwg.mxu0
    %655 = vxpose.xlu0.b32.start [1/16] %v507, 128
    %656 = vxpose.xlu0.b32.cont [2/16] %v508, 128
    %657 = vxpose.xlu0.b32.cont [3/16] %v509, 128
    %658 = vxpose.xlu0.b32.cont [4/16] 0.0, 128
    %659 = vxpose.xlu0.b32.cont [5/16] 0.0, 128
    %660 = vxpose.xlu0.b32.cont [6/16] 0.0, 128
    %661 = vxpose.xlu0.b32.cont [7/16] 0.0, 128
    %662 = vxpose.xlu0.b32.cont [8/16] 0.0, 128
    %663 = vxpose.xlu0.b32.cont [9/16] 0.0, 128
    %664 = vxpose.xlu0.b32.cont [10/16] 0.0, 128
    %665 = vxpose.xlu0.b32.cont [11/16] 0.0, 128
    %666 = vxpose.xlu0.b32.cont [12/16] 0.0, 128
    %667 = vxpose.xlu0.b32.cont [13/16] 0.0, 128
    %668 = vxpose.xlu0.b32.cont [14/16] 0.0, 128
    %669 = vxpose.xlu0.b32.cont [15/16] 0.0, 128
    %670 = vxpose.xlu0.b32.end [16/16] 0.0, 128
    %v671 = vpop.trf.xlu0
    %v672 = vpop.trf.xlu0
    %v673 = vpop.trf.xlu0
    %v674 = vpop.trf.xlu0
    %v675 = vpop.trf.xlu0
    %v676 = vpop.trf.xlu0
    %v677 = vpop.trf.xlu0
    %v678 = vpop.trf.xlu0
    %v679 = vpop.trf.xlu0
    %v680 = vpop.trf.xlu0
    %v681 = vpop.trf.xlu0
    %v682 = vpop.trf.xlu0
    %v683 = vpop.trf.xlu0
    %v684 = vpop.trf.xlu0
    %v685 = vpop.trf.xlu0
    %v686 = vpop.trf.xlu0
    %v688 = vsel %vm398, %v671, 0
    %v691 = vsel %vm398, %v672, 0
    %v694 = vsel %vm398, %v673, 0
    %v697 = vsel %vm398, %v674, 0
    %v700 = vsel %vm398, %v675, 0
    %v703 = vsel %vm398, %v676, 0
    %705 = vmatprep.subr.mxu0 0.0
    %706 = vmatpush1.msra.mxu0 0.0
    %707 = vmatprep.subr.mxu0 0.0
    %708 = vmatpush1.msra.mxu0 0.0
    %709 = vmatprep.subr.mxu0 0.0
    %710 = vmatpush1.msra.mxu0 0.0
    %711 = vmatprep.subr.mxu0 0.0
    %712 = vmatpush1.msra.mxu0 0.0
    %713 = vmatprep.subr.mxu0 0.0
    %714 = vmatpush1.msra.mxu0 0.0
    %715 = vmatprep.subr.mxu0 0.0
    %716 = vmatpush1.msra.mxu0 0.0
    %717 = vmatprep.subr.mxu0 0.0
    %718 = vmatpush1.msra.mxu0 0.0
    %719 = vmatprep.subr.mxu0 0.0
    %720 = vmatpush1.msra.mxu0 0.0
    %721 = vmatprep.subr.mxu0 0.0
    %722 = vmatpush1.msra.mxu0 0.0
    %723 = vmatprep.subr.mxu0 0.0
    %724 = vmatpush1.msra.mxu0 0.0
    %725 = vmatprep.subr.mxu0 0.0
    %726 = vmatpush1.msra.mxu0 0.0
    %727 = vmatprep.subr.mxu0 0.0
    %728 = vmatpush1.msra.mxu0 0.0
    %729 = vmatprep.subr.mxu0 0.0
    %730 = vmatpush1.msra.mxu0 0.0
    %731 = vmatprep.subr.mxu0 0.0
    %732 = vmatpush1.msra.mxu0 %v490
    %733 = vmatprep.subr.mxu0 0.0
    %734 = vmatpush1.msra.mxu0 %v489
    %735 = vmatprep.subr.mxu0 0.0
    %736 = vmatpush1.msra.mxu0 %v488
    %737 = vmatprep.subr.mxu0 0.0
    %738 = vmatpush2.msra.mxu0 0.0
    %739 = vmatprep.subr.mxu0 0.0
    %740 = vmatpush2.msra.mxu0 0.0
    %741 = vmatprep.subr.mxu0 0.0
    %742 = vmatpush2.msra.mxu0 0.0
    %743 = vmatprep.subr.mxu0 0.0
    %744 = vmatpush2.msra.mxu0 0.0
    %745 = vmatprep.subr.mxu0 0.0
    %746 = vmatpush2.msra.mxu0 0.0
    %747 = vmatprep.subr.mxu0 0.0
    %748 = vmatpush2.msra.mxu0 0.0
    %749 = vmatprep.subr.mxu0 0.0
    %750 = vmatpush2.msra.mxu0 0.0
    %751 = vmatprep.subr.mxu0 0.0
    %752 = vmatpush2.msra.mxu0 0.0
    %753 = vmatprep.subr.mxu0 0.0
    %754 = vmatpush2.msra.mxu0 0.0
    %755 = vmatprep.subr.mxu0 0.0
    %756 = vmatpush2.msra.mxu0 0.0
    %757 = vmatprep.subr.mxu0 0.0
    %758 = vmatpush2.msra.mxu0 0.0
    %759 = vmatprep.subr.mxu0 0.0
    %760 = vmatpush2.msra.mxu0 0.0
    %761 = vmatprep.subr.mxu0 0.0
    %762 = vmatpush2.msra.mxu0 0.0
    %763 = vmatprep.subr.mxu0 0.0
    %764 = vmatpush2.msra.mxu0 0.0
    %765 = vmatprep.subr.mxu0 0.0
    %766 = vmatpush2.msra.mxu0 0.0
    %767 = vmatprep.subr.mxu0 0.0
    %768 = vmatpush2.msra.mxu0 0.0
    %769 = vmatprep.mubr.f32.mxu0 0.0
    %770 = vmatmul.mubr.f32.gmra.mxu0 %v688
    %v771 = vpop.f32.mrf.mxu0
    %v772 = vadd.f32 %v627, %v771
    %v773 = vpop.f32.mrf.mxu0
    %774 = vmatprep.mubr.f32.mxu0 0.0
    %775 = vmatmul.mubr.f32.gmra.mxu0 %v691
    %v776 = vpop.f32.mrf.mxu0
    %v777 = vadd.f32 %v632, %v776
    %v778 = vpop.f32.mrf.mxu0
    %779 = vmatprep.mubr.f32.mxu0 0.0
    %780 = vmatmul.mubr.f32.gmra.mxu0 %v694
    %v781 = vpop.f32.mrf.mxu0
    %v782 = vadd.f32 %v637, %v781
    %v783 = vpop.f32.mrf.mxu0
    %784 = vmatprep.mubr.f32.mxu0 0.0
    %785 = vmatmul.mubr.f32.gmra.mxu0 %v697
    %v786 = vpop.f32.mrf.mxu0
    %v787 = vadd.f32 %v642, %v786
    %v788 = vpop.f32.mrf.mxu0
    %789 = vmatprep.mubr.f32.mxu0 0.0
    %790 = vmatmul.mubr.f32.gmra.mxu0 %v700
    %v791 = vpop.f32.mrf.mxu0
    %v792 = vadd.f32 %v647, %v791
    %v793 = vpop.f32.mrf.mxu0
    %794 = vmatprep.mubr.f32.mxu0 0.0
    %795 = vmatmul.mubr.f32.gmra.mxu0 %v703
    %v796 = vpop.f32.mrf.mxu0
    %v797 = vadd.f32 %v652, %v796
    %v798 = vpop.f32.mrf.mxu0
    %799 = vdwg.mxu0
    %v800 = vmax.f32 %v772, 0.0
    %v801 = vmax.f32 %v777, 0.0
    %v802 = vmax.f32 %v782, 0.0
    %v803 = vmax.f32 %v787, 0.0
    %v804 = vmax.f32 %v792, 0.0
    %v805 = vmax.f32 %v797, 0.0
    %vm806 = vcmask 392192
    %v808 = vsel %vm806, %v520, 0
    %v811 = vsel %vm806, %v521, 0
    %v814 = vsel %vm806, %v522, 0
    %816 = vmatprep.subr.mxu0 0.0
    %817 = vmatpush1.msra.mxu0 0.0
    %818 = vmatprep.subr.mxu0 0.0
    %819 = vmatpush1.msra.mxu0 0.0
    %820 = vmatprep.subr.mxu0 0.0
    %821 = vmatpush1.msra.mxu0 0.0
    %822 = vmatprep.subr.mxu0 0.0
    %823 = vmatpush1.msra.mxu0 0.0
    %824 = vmatprep.subr.mxu0 0.0
    %825 = vmatpush1.msra.mxu0 0.0
    %826 = vmatprep.subr.mxu0 0.0
    %827 = vmatpush1.msra.mxu0 0.0
    %828 = vmatprep.subr.mxu0 0.0
    %829 = vmatpush1.msra.mxu0 0.0
    %830 = vmatprep.subr.mxu0 0.0
    %831 = vmatpush1.msra.mxu0 0.0
    %832 = vmatprep.subr.mxu0 0.0
    %833 = vmatpush1.msra.mxu0 0.0
    %834 = vmatprep.subr.mxu0 0.0
    %835 = vmatpush1.msra.mxu0 0.0
    %836 = vmatprep.subr.mxu0 0.0
    %837 = vmatpush1.msra.mxu0 %v805
    %838 = vmatprep.subr.mxu0 0.0
    %839 = vmatpush1.msra.mxu0 %v804
    %840 = vmatprep.subr.mxu0 0.0
    %841 = vmatpush1.msra.mxu0 %v803
    %842 = vmatprep.subr.mxu0 0.0
    %843 = vmatpush1.msra.mxu0 %v802
    %844 = vmatprep.subr.mxu0 0.0
    %845 = vmatpush1.msra.mxu0 %v801
    %846 = vmatprep.subr.mxu0 0.0
    %847 = vmatpush1.msra.mxu0 %v800
    %848 = vmatprep.subr.mxu0 0.0
    %849 = vmatpush2.msra.mxu0 0.0
    %850 = vmatprep.subr.mxu0 0.0
    %851 = vmatpush2.msra.mxu0 0.0
    %852 = vmatprep.subr.mxu0 0.0
    %853 = vmatpush2.msra.mxu0 0.0
    %854 = vmatprep.subr.mxu0 0.0
    %855 = vmatpush2.msra.mxu0 0.0
    %856 = vmatprep.subr.mxu0 0.0
    %857 = vmatpush2.msra.mxu0 0.0
    %858 = vmatprep.subr.mxu0 0.0
    %859 = vmatpush2.msra.mxu0 0.0
    %860 = vmatprep.subr.mxu0 0.0
    %861 = vmatpush2.msra.mxu0 0.0
    %862 = vmatprep.subr.mxu0 0.0
    %863 = vmatpush2.msra.mxu0 0.0
    %864 = vmatprep.subr.mxu0 0.0
    %865 = vmatpush2.msra.mxu0 0.0
    %866 = vmatprep.subr.mxu0 0.0
    %867 = vmatpush2.msra.mxu0 0.0
    %868 = vmatprep.subr.mxu0 0.0
    %869 = vmatpush2.msra.mxu0 0.0
    %870 = vmatprep.subr.mxu0 0.0
    %871 = vmatpush2.msra.mxu0 0.0
    %872 = vmatprep.subr.mxu0 0.0
    %873 = vmatpush2.msra.mxu0 0.0
    %874 = vmatprep.subr.mxu0 0.0
    %875 = vmatpush2.msra.mxu0 0.0
    %876 = vmatprep.subr.mxu0 0.0
    %877 = vmatpush2.msra.mxu0 0.0
    %878 = vmatprep.subr.mxu0 0.0
    %879 = vmatpush2.msra.mxu0 0.0
    %880 = vmatprep.mubr.f32.mxu0 0.0
    %881 = vmatmul.mubr.f32.gmra.mxu0 %v808
    %v882 = vpop.f32.mrf.mxu0
    %v883 = vadd.f32 %v488, %v882
    %v884 = vpop.f32.mrf.mxu0
    %885 = vmatprep.mubr.f32.mxu0 0.0
    %886 = vmatmul.mubr.f32.gmra.mxu0 %v811
    %v887 = vpop.f32.mrf.mxu0
    %v888 = vadd.f32 %v489, %v887
    %v889 = vpop.f32.mrf.mxu0
    %890 = vmatprep.mubr.f32.mxu0 0.0
    %891 = vmatmul.mubr.f32.gmra.mxu0 %v814
    %v892 = vpop.f32.mrf.mxu0
    %v893 = vadd.f32 %v490, %v892
    %v894 = vpop.f32.mrf.mxu0
    %895 = vdwg.mxu0
    %v896 = vld [vmem:[%s10] sm:$0xff]
    %v897 = vld [vmem:[%s10 + $0x8] sm:$0xff]
    %v898 = vld [vmem:[%s10 + $0x10] sm:$0xff]
    %v899 = vld [vmem:[%s10 + $0x18] sm:$0xff]
    %v900 = vld [vmem:[#allocation7] sm:$0x1]
    %v902 = vlaneseq
    %v903 = vshrl.u32 %v902, 7
    %v904 = vsub.s32 0, %v903
    %v905 = vrot.slane %v900, %v904
    %vm907 = vcmask 261120
    %v909 = vsel %vm907, %v883, 0
    %v912 = vsel %vm907, %v888, 0
    %v915 = vsel %vm907, %v893, 0
    %917 = vmatprep.subr.mxu0 0.0
    %918 = vmatpush1.msra.mxu0 0.0
    %919 = vmatprep.subr.mxu0 0.0
    %920 = vmatpush1.msra.mxu0 0.0
    %921 = vmatprep.subr.mxu0 0.0
    %922 = vmatpush1.msra.mxu0 0.0
    %923 = vmatprep.subr.mxu0 0.0
    %924 = vmatpush1.msra.mxu0 0.0
    %925 = vmatprep.subr.mxu0 0.0
    %926 = vmatpush1.msra.mxu0 0.0
    %927 = vmatprep.subr.mxu0 0.0
    %928 = vmatpush1.msra.mxu0 0.0
    %929 = vmatprep.subr.mxu0 0.0
    %930 = vmatpush1.msra.mxu0 0.0
    %931 = vmatprep.subr.mxu0 0.0
    %932 = vmatpush1.msra.mxu0 0.0
    %933 = vmatprep.subr.mxu0 0.0
    %934 = vmatpush1.msra.mxu0 0.0
    %935 = vmatprep.subr.mxu0 0.0
    %936 = vmatpush1.msra.mxu0 0.0
    %937 = vmatprep.subr.mxu0 0.0
    %938 = vmatpush1.msra.mxu0 0.0
    %939 = vmatprep.subr.mxu0 0.0
    %940 = vmatpush1.msra.mxu0 0.0
    %941 = vmatprep.subr.mxu0 0.0
    %942 = vmatpush1.msra.mxu0 %v899
    %943 = vmatprep.subr.mxu0 0.0
    %944 = vmatpush1.msra.mxu0 %v898
    %945 = vmatprep.subr.mxu0 0.0
    %946 = vmatpush1.msra.mxu0 %v897
    %947 = vmatprep.subr.mxu0 0.0
    %948 = vmatpush1.msra.mxu0 %v896
    %949 = vmatprep.subr.mxu0 0.0
    %950 = vmatpush2.msra.mxu0 0.0
    %951 = vmatprep.subr.mxu0 0.0
    %952 = vmatpush2.msra.mxu0 0.0
    %953 = vmatprep.subr.mxu0 0.0
    %954 = vmatpush2.msra.mxu0 0.0
    %955 = vmatprep.subr.mxu0 0.0
    %956 = vmatpush2.msra.mxu0 0.0
    %957 = vmatprep.subr.mxu0 0.0
    %958 = vmatpush2.msra.mxu0 0.0
    %959 = vmatprep.subr.mxu0 0.0
    %960 = vmatpush2.msra.mxu0 0.0
    %961 = vmatprep.subr.mxu0 0.0
    %962 = vmatpush2.msra.mxu0 0.0
    %963 = vmatprep.subr.mxu0 0.0
    %964 = vmatpush2.msra.mxu0 0.0
    %965 = vmatprep.subr.mxu0 0.0
    %966 = vmatpush2.msra.mxu0 0.0
    %967 = vmatprep.subr.mxu0 0.0
    %968 = vmatpush2.msra.mxu0 0.0
    %969 = vmatprep.subr.mxu0 0.0
    %970 = vmatpush2.msra.mxu0 0.0
    %971 = vmatprep.subr.mxu0 0.0
    %972 = vmatpush2.msra.mxu0 0.0
    %973 = vmatprep.subr.mxu0 0.0
    %974 = vmatpush2.msra.mxu0 0.0
    %975 = vmatprep.subr.mxu0 0.0
    %976 = vmatpush2.msra.mxu0 0.0
    %977 = vmatprep.subr.mxu0 0.0
    %978 = vmatpush2.msra.mxu0 0.0
    %979 = vmatprep.subr.mxu0 0.0
    %980 = vmatpush2.msra.mxu0 0.0
    %981 = vmatprep.mubr.f32.mxu0 0.0
    %982 = vmatmul.mubr.f32.gmra.mxu0 %v909
    %v983 = vpop.f32.mrf.mxu0
    %v984 = vadd.f32 %v905, %v983
    %v985 = vpop.f32.mrf.mxu0
    %986 = vmatprep.mubr.f32.mxu0 0.0
    %987 = vmatmul.mubr.f32.gmra.mxu0 %v912
    %v988 = vpop.f32.mrf.mxu0
    %v989 = vadd.f32 %v905, %v988
    %v990 = vpop.f32.mrf.mxu0
    %991 = vmatprep.mubr.f32.mxu0 0.0
    %992 = vmatmul.mubr.f32.gmra.mxu0 %v915
    %v993 = vpop.f32.mrf.mxu0
    %v994 = vadd.f32 %v905, %v993
    %v995 = vpop.f32.mrf.mxu0
    %996 = vdwg.mxu0
    %v997 = vmax.f32 %v984, 0.0
    %v998 = vmax.f32 %v989, 0.0
    %v999 = vmax.f32 %v994, 0.0
    %v1000 = vld [vmem:[#allocation9] sm:$0xff]
    %v1001 = vld [vmem:[#allocation9 + $0x8] sm:$0xff]
    %v1002 = vld [vmem:[#allocation9 + $0x10] sm:$0xff]
    %v1003 = vld [vmem:[#allocation9 + $0x18] sm:$0xff]
    %v1004 = vld [vmem:[#allocation10] sm:$0x1]
    %v1006 = vlaneseq
    %v1007 = vshrl.u32 %v1006, 7
    %v1008 = vsub.s32 0, %v1007
    %v1009 = vrot.slane %v1004, %v1008
    %v1012 = vsel %vm907, %v997, 0
    %v1015 = vsel %vm907, %v998, 0
    %v1018 = vsel %vm907, %v999, 0
    %1020 = vmatprep.subr.mxu0 0.0
    %1021 = vmatpush1.msra.mxu0 0.0
    %1022 = vmatprep.subr.mxu0 0.0
    %1023 = vmatpush1.msra.mxu0 0.0
    %1024 = vmatprep.subr.mxu0 0.0
    %1025 = vmatpush1.msra.mxu0 0.0
    %1026 = vmatprep.subr.mxu0 0.0
    %1027 = vmatpush1.msra.mxu0 0.0
    %1028 = vmatprep.subr.mxu0 0.0
    %1029 = vmatpush1.msra.mxu0 0.0
    %1030 = vmatprep.subr.mxu0 0.0
    %1031 = vmatpush1.msra.mxu0 0.0
    %1032 = vmatprep.subr.mxu0 0.0
    %1033 = vmatpush1.msra.mxu0 0.0
    %1034 = vmatprep.subr.mxu0 0.0
    %1035 = vmatpush1.msra.mxu0 0.0
    %1036 = vmatprep.subr.mxu0 0.0
    %1037 = vmatpush1.msra.mxu0 0.0
    %1038 = vmatprep.subr.mxu0 0.0
    %1039 = vmatpush1.msra.mxu0 0.0
    %1040 = vmatprep.subr.mxu0 0.0
    %1041 = vmatpush1.msra.mxu0 0.0
    %1042 = vmatprep.subr.mxu0 0.0
    %1043 = vmatpush1.msra.mxu0 0.0
    %1044 = vmatprep.subr.mxu0 0.0
    %1045 = vmatpush1.msra.mxu0 %v1003
    %1046 = vmatprep.subr.mxu0 0.0
    %1047 = vmatpush1.msra.mxu0 %v1002
    %1048 = vmatprep.subr.mxu0 0.0
    %1049 = vmatpush1.msra.mxu0 %v1001
    %1050 = vmatprep.subr.mxu0 0.0
    %1051 = vmatpush1.msra.mxu0 %v1000
    %1052 = vmatprep.subr.mxu0 0.0
    %1053 = vmatpush2.msra.mxu0 0.0
    %1054 = vmatprep.subr.mxu0 0.0
    %1055 = vmatpush2.msra.mxu0 0.0
    %1056 = vmatprep.subr.mxu0 0.0
    %1057 = vmatpush2.msra.mxu0 0.0
    %1058 = vmatprep.subr.mxu0 0.0
    %1059 = vmatpush2.msra.mxu0 0.0
    %1060 = vmatprep.subr.mxu0 0.0
    %1061 = vmatpush2.msra.mxu0 0.0
    %1062 = vmatprep.subr.mxu0 0.0
    %1063 = vmatpush2.msra.mxu0 0.0
    %1064 = vmatprep.subr.mxu0 0.0
    %1065 = vmatpush2.msra.mxu0 0.0
    %1066 = vmatprep.subr.mxu0 0.0
    %1067 = vmatpush2.msra.mxu0 0.0
    %1068 = vmatprep.subr.mxu0 0.0
    %1069 = vmatpush2.msra.mxu0 0.0
    %1070 = vmatprep.subr.mxu0 0.0
    %1071 = vmatpush2.msra.mxu0 0.0
    %1072 = vmatprep.subr.mxu0 0.0
    %1073 = vmatpush2.msra.mxu0 0.0
    %1074 = vmatprep.subr.mxu0 0.0
    %1075 = vmatpush2.msra.mxu0 0.0
    %1076 = vmatprep.subr.mxu0 0.0
    %1077 = vmatpush2.msra.mxu0 0.0
    %1078 = vmatprep.subr.mxu0 0.0
    %1079 = vmatpush2.msra.mxu0 0.0
    %1080 = vmatprep.subr.mxu0 0.0
    %1081 = vmatpush2.msra.mxu0 0.0
    %1082 = vmatprep.subr.mxu0 0.0
    %1083 = vmatpush2.msra.mxu0 0.0
    %1084 = vmatprep.mubr.f32.mxu0 0.0
    %1085 = vmatmul.mubr.f32.gmra.mxu0 %v1012
    %v1086 = vpop.f32.mrf.mxu0
    %v1087 = vadd.f32 %v1009, %v1086
    %v1088 = vpop.f32.mrf.mxu0
    %1089 = vmatprep.mubr.f32.mxu0 0.0
    %1090 = vmatmul.mubr.f32.gmra.mxu0 %v1015
    %v1091 = vpop.f32.mrf.mxu0
    %v1092 = vadd.f32 %v1009, %v1091
    %v1093 = vpop.f32.mrf.mxu0
    %1094 = vmatprep.mubr.f32.mxu0 0.0
    %1095 = vmatmul.mubr.f32.gmra.mxu0 %v1018
    %v1096 = vpop.f32.mrf.mxu0
    %v1097 = vadd.f32 %v1009, %v1096
    %v1098 = vpop.f32.mrf.mxu0
    %1099 = vdwg.mxu0
    %s1100 = scalar_lea.vmem %s8, 2
    %v1101 = vld [vmem:[%s1100] sm:$0x3]
    %s1102 = scalar_lea.vmem [#allocation6], 1
    %v1103 = vld [vmem:[%s1102] sm:$0x1]
    %v1105 = vlaneseq
    %v1106 = vshrl.u32 %v1105, 7
    %v1107 = vsub.s32 0, %v1106
    %v1108 = vrot.slane %v1103, %v1107
    %v1111 = vsel %vm556, %v1101, 0
    %1113 = vmatprep.subr.mxu0 0.0
    %1114 = vmatpush1.msra.mxu0 0.0
    %1115 = vmatprep.subr.mxu0 0.0
    %1116 = vmatpush1.msra.mxu0 0.0
    %1117 = vmatprep.subr.mxu0 0.0
    %1118 = vmatpush1.msra.mxu0 0.0
    %1119 = vmatprep.subr.mxu0 0.0
    %1120 = vmatpush1.msra.mxu0 0.0
    %1121 = vmatprep.subr.mxu0 0.0
    %1122 = vmatpush1.msra.mxu0 0.0
    %1123 = vmatprep.subr.mxu0 0.0
    %1124 = vmatpush1.msra.mxu0 0.0
    %1125 = vmatprep.subr.mxu0 0.0
    %1126 = vmatpush1.msra.mxu0 0.0
    %1127 = vmatprep.subr.mxu0 0.0
    %1128 = vmatpush1.msra.mxu0 0.0
    %1129 = vmatprep.subr.mxu0 0.0
    %1130 = vmatpush1.msra.mxu0 0.0
    %1131 = vmatprep.subr.mxu0 0.0
    %1132 = vmatpush1.msra.mxu0 0.0
    %1133 = vmatprep.subr.mxu0 0.0
    %1134 = vmatpush1.msra.mxu0 0.0
    %1135 = vmatprep.subr.mxu0 0.0
    %1136 = vmatpush1.msra.mxu0 0.0
    %1137 = vmatprep.subr.mxu0 0.0
    %1138 = vmatpush1.msra.mxu0 0.0
    %1139 = vmatprep.subr.mxu0 0.0
    %1140 = vmatpush1.msra.mxu0 0.0
    %1141 = vmatprep.subr.mxu0 0.0
    %1142 = vmatpush1.msra.mxu0 0.0
    %1143 = vmatprep.subr.mxu0 0.0
    %1144 = vmatpush1.msra.mxu0 %v1111
    %1145 = vmatprep.subr.mxu0 0.0
    %1146 = vmatpush2.msra.mxu0 0.0
    %1147 = vmatprep.subr.mxu0 0.0
    %1148 = vmatpush2.msra.mxu0 0.0
    %1149 = vmatprep.subr.mxu0 0.0
    %1150 = vmatpush2.msra.mxu0 0.0
    %1151 = vmatprep.subr.mxu0 0.0
    %1152 = vmatpush2.msra.mxu0 0.0
    %1153 = vmatprep.subr.mxu0 0.0
    %1154 = vmatpush2.msra.mxu0 0.0
    %1155 = vmatprep.subr.mxu0 0.0
    %1156 = vmatpush2.msra.mxu0 0.0
    %1157 = vmatprep.subr.mxu0 0.0
    %1158 = vmatpush2.msra.mxu0 0.0
    %1159 = vmatprep.subr.mxu0 0.0
    %1160 = vmatpush2.msra.mxu0 0.0
    %1161 = vmatprep.subr.mxu0 0.0
    %1162 = vmatpush2.msra.mxu0 0.0
    %1163 = vmatprep.subr.mxu0 0.0
    %1164 = vmatpush2.msra.mxu0 0.0
    %1165 = vmatprep.subr.mxu0 0.0
    %1166 = vmatpush2.msra.mxu0 0.0
    %1167 = vmatprep.subr.mxu0 0.0
    %1168 = vmatpush2.msra.mxu0 0.0
    %1169 = vmatprep.subr.mxu0 0.0
    %1170 = vmatpush2.msra.mxu0 0.0
    %1171 = vmatprep.subr.mxu0 0.0
    %1172 = vmatpush2.msra.mxu0 0.0
    %1173 = vmatprep.subr.mxu0 0.0
    %1174 = vmatpush2.msra.mxu0 0.0
    %1175 = vmatprep.subr.mxu0 0.0
    %1176 = vmatpush2.msra.mxu0 0.0
    %1177 = vmatprep.mubr.f32.mxu0 0.0
    %1178 = vmatmul.mubr.f32.gmra.mxu0 %v539
    %v1179 = vpop.f32.mrf.mxu0
    %v1180 = vadd.f32 %v1108, %v1179
    %v1181 = vpop.f32.mrf.mxu0
    %1182 = vmatprep.mubr.f32.mxu0 0.0
    %1183 = vmatmul.mubr.f32.gmra.mxu0 %v542
    %v1184 = vpop.f32.mrf.mxu0
    %v1185 = vadd.f32 %v1108, %v1184
    %v1186 = vpop.f32.mrf.mxu0
    %1187 = vmatprep.mubr.f32.mxu0 0.0
    %1188 = vmatmul.mubr.f32.gmra.mxu0 %v545
    %v1189 = vpop.f32.mrf.mxu0
    %v1190 = vadd.f32 %v1108, %v1189
    %v1191 = vpop.f32.mrf.mxu0
    %1192 = vmatprep.mubr.f32.mxu0 0.0
    %1193 = vmatmul.mubr.f32.gmra.mxu0 %v548
    %v1194 = vpop.f32.mrf.mxu0
    %v1195 = vadd.f32 %v1108, %v1194
    %v1196 = vpop.f32.mrf.mxu0
    %1197 = vmatprep.mubr.f32.mxu0 0.0
    %1198 = vmatmul.mubr.f32.gmra.mxu0 %v551
    %v1199 = vpop.f32.mrf.mxu0
    %v1200 = vadd.f32 %v1108, %v1199
    %v1201 = vpop.f32.mrf.mxu0
    %1202 = vmatprep.mubr.f32.mxu0 0.0
    %1203 = vmatmul.mubr.f32.gmra.mxu0 %v554
    %v1204 = vpop.f32.mrf.mxu0
    %v1205 = vadd.f32 %v1108, %v1204
    %v1206 = vpop.f32.mrf.mxu0
    %1207 = vdwg.mxu0
    %1208 = vmatprep.subr.mxu0 0.0
    %1209 = vmatpush1.msra.mxu0 0.0
    %1210 = vmatprep.subr.mxu0 0.0
    %1211 = vmatpush1.msra.mxu0 0.0
    %1212 = vmatprep.subr.mxu0 0.0
    %1213 = vmatpush1.msra.mxu0 0.0
    %1214 = vmatprep.subr.mxu0 0.0
    %1215 = vmatpush1.msra.mxu0 0.0
    %1216 = vmatprep.subr.mxu0 0.0
    %1217 = vmatpush1.msra.mxu0 0.0
    %1218 = vmatprep.subr.mxu0 0.0
    %1219 = vmatpush1.msra.mxu0 0.0
    %1220 = vmatprep.subr.mxu0 0.0
    %1221 = vmatpush1.msra.mxu0 0.0
    %1222 = vmatprep.subr.mxu0 0.0
    %1223 = vmatpush1.msra.mxu0 0.0
    %1224 = vmatprep.subr.mxu0 0.0
    %1225 = vmatpush1.msra.mxu0 0.0
    %1226 = vmatprep.subr.mxu0 0.0
    %1227 = vmatpush1.msra.mxu0 0.0
    %1228 = vmatprep.subr.mxu0 0.0
    %1229 = vmatpush1.msra.mxu0 0.0
    %1230 = vmatprep.subr.mxu0 0.0
    %1231 = vmatpush1.msra.mxu0 0.0
    %1232 = vmatprep.subr.mxu0 0.0
    %1233 = vmatpush1.msra.mxu0 0.0
    %1234 = vmatprep.subr.mxu0 0.0
    %1235 = vmatpush1.msra.mxu0 %v1097
    %1236 = vmatprep.subr.mxu0 0.0
    %1237 = vmatpush1.msra.mxu0 %v1092
    %1238 = vmatprep.subr.mxu0 0.0
    %1239 = vmatpush1.msra.mxu0 %v1087
    %1240 = vmatprep.subr.mxu0 0.0
    %1241 = vmatpush2.msra.mxu0 0.0
    %1242 = vmatprep.subr.mxu0 0.0
    %1243 = vmatpush2.msra.mxu0 0.0
    %1244 = vmatprep.subr.mxu0 0.0
    %1245 = vmatpush2.msra.mxu0 0.0
    %1246 = vmatprep.subr.mxu0 0.0
    %1247 = vmatpush2.msra.mxu0 0.0
    %1248 = vmatprep.subr.mxu0 0.0
    %1249 = vmatpush2.msra.mxu0 0.0
    %1250 = vmatprep.subr.mxu0 0.0
    %1251 = vmatpush2.msra.mxu0 0.0
    %1252 = vmatprep.subr.mxu0 0.0
    %1253 = vmatpush2.msra.mxu0 0.0
    %1254 = vmatprep.subr.mxu0 0.0
    %1255 = vmatpush2.msra.mxu0 0.0
    %1256 = vmatprep.subr.mxu0 0.0
    %1257 = vmatpush2.msra.mxu0 0.0
    %1258 = vmatprep.subr.mxu0 0.0
    %1259 = vmatpush2.msra.mxu0 0.0
    %1260 = vmatprep.subr.mxu0 0.0
    %1261 = vmatpush2.msra.mxu0 0.0
    %1262 = vmatprep.subr.mxu0 0.0
    %1263 = vmatpush2.msra.mxu0 0.0
    %1264 = vmatprep.subr.mxu0 0.0
    %1265 = vmatpush2.msra.mxu0 0.0
    %1266 = vmatprep.subr.mxu0 0.0
    %1267 = vmatpush2.msra.mxu0 0.0
    %1268 = vmatprep.subr.mxu0 0.0
    %1269 = vmatpush2.msra.mxu0 0.0
    %1270 = vmatprep.subr.mxu0 0.0
    %1271 = vmatpush2.msra.mxu0 0.0
    %1272 = vmatprep.mubr.f32.mxu0 0.0
    %1273 = vmatmul.mubr.f32.gmra.mxu0 %v688
    %v1274 = vpop.f32.mrf.mxu0
    %v1275 = vadd.f32 %v1180, %v1274
    %v1276 = vpop.f32.mrf.mxu0
    %1277 = vmatprep.mubr.f32.mxu0 0.0
    %1278 = vmatmul.mubr.f32.gmra.mxu0 %v691
    %v1279 = vpop.f32.mrf.mxu0
    %v1280 = vadd.f32 %v1185, %v1279
    %v1281 = vpop.f32.mrf.mxu0
    %1282 = vmatprep.mubr.f32.mxu0 0.0
    %1283 = vmatmul.mubr.f32.gmra.mxu0 %v694
    %v1284 = vpop.f32.mrf.mxu0
    %v1285 = vadd.f32 %v1190, %v1284
    %v1286 = vpop.f32.mrf.mxu0
    %1287 = vmatprep.mubr.f32.mxu0 0.0
    %1288 = vmatmul.mubr.f32.gmra.mxu0 %v697
    %v1289 = vpop.f32.mrf.mxu0
    %v1290 = vadd.f32 %v1195, %v1289
    %v1291 = vpop.f32.mrf.mxu0
    %1292 = vmatprep.mubr.f32.mxu0 0.0
    %1293 = vmatmul.mubr.f32.gmra.mxu0 %v700
    %v1294 = vpop.f32.mrf.mxu0
    %v1295 = vadd.f32 %v1200, %v1294
    %v1296 = vpop.f32.mrf.mxu0
    %1297 = vmatprep.mubr.f32.mxu0 0.0
    %1298 = vmatmul.mubr.f32.gmra.mxu0 %v703
    %v1299 = vpop.f32.mrf.mxu0
    %v1300 = vadd.f32 %v1205, %v1299
    %v1301 = vpop.f32.mrf.mxu0
    %1302 = vdwg.mxu0
    %v1303 = vmax.f32 %v1275, 0.0
    %v1304 = vmax.f32 %v1280, 0.0
    %v1305 = vmax.f32 %v1285, 0.0
    %v1306 = vmax.f32 %v1290, 0.0
    %v1307 = vmax.f32 %v1295, 0.0
    %v1308 = vmax.f32 %v1300, 0.0
    %1309 = vmatprep.subr.mxu0 0.0
    %1310 = vmatpush1.msra.mxu0 0.0
    %1311 = vmatprep.subr.mxu0 0.0
    %1312 = vmatpush1.msra.mxu0 0.0
    %1313 = vmatprep.subr.mxu0 0.0
    %1314 = vmatpush1.msra.mxu0 0.0
    %1315 = vmatprep.subr.mxu0 0.0
    %1316 = vmatpush1.msra.mxu0 0.0
    %1317 = vmatprep.subr.mxu0 0.0
    %1318 = vmatpush1.msra.mxu0 0.0
    %1319 = vmatprep.subr.mxu0 0.0
    %1320 = vmatpush1.msra.mxu0 0.0
    %1321 = vmatprep.subr.mxu0 0.0
    %1322 = vmatpush1.msra.mxu0 0.0
    %1323 = vmatprep.subr.mxu0 0.0
    %1324 = vmatpush1.msra.mxu0 0.0
    %1325 = vmatprep.subr.mxu0 0.0
    %1326 = vmatpush1.msra.mxu0 0.0
    %1327 = vmatprep.subr.mxu0 0.0
    %1328 = vmatpush1.msra.mxu0 0.0
    %1329 = vmatprep.subr.mxu0 0.0
    %1330 = vmatpush1.msra.mxu0 %v1308
    %1331 = vmatprep.subr.mxu0 0.0
    %1332 = vmatpush1.msra.mxu0 %v1307
    %1333 = vmatprep.subr.mxu0 0.0
    %1334 = vmatpush1.msra.mxu0 %v1306
    %1335 = vmatprep.subr.mxu0 0.0
    %1336 = vmatpush1.msra.mxu0 %v1305
    %1337 = vmatprep.subr.mxu0 0.0
    %1338 = vmatpush1.msra.mxu0 %v1304
    %1339 = vmatprep.subr.mxu0 0.0
    %1340 = vmatpush1.msra.mxu0 %v1303
    %1341 = vmatprep.subr.mxu0 0.0
    %1342 = vmatpush2.msra.mxu0 0.0
    %1343 = vmatprep.subr.mxu0 0.0
    %1344 = vmatpush2.msra.mxu0 0.0
    %1345 = vmatprep.subr.mxu0 0.0
    %1346 = vmatpush2.msra.mxu0 0.0
    %1347 = vmatprep.subr.mxu0 0.0
    %1348 = vmatpush2.msra.mxu0 0.0
    %1349 = vmatprep.subr.mxu0 0.0
    %1350 = vmatpush2.msra.mxu0 0.0
    %1351 = vmatprep.subr.mxu0 0.0
    %1352 = vmatpush2.msra.mxu0 0.0
    %1353 = vmatprep.subr.mxu0 0.0
    %1354 = vmatpush2.msra.mxu0 0.0
    %1355 = vmatprep.subr.mxu0 0.0
    %1356 = vmatpush2.msra.mxu0 0.0
    %1357 = vmatprep.subr.mxu0 0.0
    %1358 = vmatpush2.msra.mxu0 0.0
    %1359 = vmatprep.subr.mxu0 0.0
    %1360 = vmatpush2.msra.mxu0 0.0
    %1361 = vmatprep.subr.mxu0 0.0
    %1362 = vmatpush2.msra.mxu0 0.0
    %1363 = vmatprep.subr.mxu0 0.0
    %1364 = vmatpush2.msra.mxu0 0.0
    %1365 = vmatprep.subr.mxu0 0.0
    %1366 = vmatpush2.msra.mxu0 0.0
    %1367 = vmatprep.subr.mxu0 0.0
    %1368 = vmatpush2.msra.mxu0 0.0
    %1369 = vmatprep.subr.mxu0 0.0
    %1370 = vmatpush2.msra.mxu0 0.0
    %1371 = vmatprep.subr.mxu0 0.0
    %1372 = vmatpush2.msra.mxu0 0.0
    %1373 = vmatprep.mubr.f32.mxu0 0.0
    %1374 = vmatmul.mubr.f32.gmra.mxu0 %v808
    %v1375 = vpop.f32.mrf.mxu0
    %v1376 = vadd.f32 %v1087, %v1375
    %v1377 = vpop.f32.mrf.mxu0
    %1378 = vmatprep.mubr.f32.mxu0 0.0
    %1379 = vmatmul.mubr.f32.gmra.mxu0 %v811
    %v1380 = vpop.f32.mrf.mxu0
    %v1381 = vadd.f32 %v1092, %v1380
    %v1382 = vpop.f32.mrf.mxu0
    %1383 = vmatprep.mubr.f32.mxu0 0.0
    %1384 = vmatmul.mubr.f32.gmra.mxu0 %v814
    %v1385 = vpop.f32.mrf.mxu0
    %v1386 = vadd.f32 %v1097, %v1385
    %v1387 = vpop.f32.mrf.mxu0
    %1388 = vdwg.mxu0
    %s1389 = scalar_lea.vmem %s10, 32
    %v1390 = vld [vmem:[%s1389] sm:$0xff]
    %v1391 = vld [vmem:[%s1389 + $0x8] sm:$0xff]
    %v1392 = vld [vmem:[%s1389 + $0x10] sm:$0xff]
    %v1393 = vld [vmem:[%s1389 + $0x18] sm:$0xff]
    %s1394 = scalar_lea.vmem [#allocation7], 1
    %v1395 = vld [vmem:[%s1394] sm:$0x1]
    %v1397 = vlaneseq
    %v1398 = vshrl.u32 %v1397, 7
    %v1399 = vsub.s32 0, %v1398
    %v1400 = vrot.slane %v1395, %v1399
    %v1403 = vsel %vm907, %v1376, 0
    %v1406 = vsel %vm907, %v1381, 0
    %v1409 = vsel %vm907, %v1386, 0
    %1411 = vmatprep.subr.mxu0 0.0
    %1412 = vmatpush1.msra.mxu0 0.0
    %1413 = vmatprep.subr.mxu0 0.0
    %1414 = vmatpush1.msra.mxu0 0.0
    %1415 = vmatprep.subr.mxu0 0.0
    %1416 = vmatpush1.msra.mxu0 0.0
    %1417 = vmatprep.subr.mxu0 0.0
    %1418 = vmatpush1.msra.mxu0 0.0
    %1419 = vmatprep.subr.mxu0 0.0
    %1420 = vmatpush1.msra.mxu0 0.0
    %1421 = vmatprep.subr.mxu0 0.0
    %1422 = vmatpush1.msra.mxu0 0.0
    %1423 = vmatprep.subr.mxu0 0.0
    %1424 = vmatpush1.msra.mxu0 0.0
    %1425 = vmatprep.subr.mxu0 0.0
    %1426 = vmatpush1.msra.mxu0 0.0
    %1427 = vmatprep.subr.mxu0 0.0
    %1428 = vmatpush1.msra.mxu0 0.0
    %1429 = vmatprep.subr.mxu0 0.0
    %1430 = vmatpush1.msra.mxu0 0.0
    %1431 = vmatprep.subr.mxu0 0.0
    %1432 = vmatpush1.msra.mxu0 0.0
    %1433 = vmatprep.subr.mxu0 0.0
    %1434 = vmatpush1.msra.mxu0 0.0
    %1435 = vmatprep.subr.mxu0 0.0
    %1436 = vmatpush1.msra.mxu0 %v1393
    %1437 = vmatprep.subr.mxu0 0.0
    %1438 = vmatpush1.msra.mxu0 %v1392
    %1439 = vmatprep.subr.mxu0 0.0
    %1440 = vmatpush1.msra.mxu0 %v1391
    %1441 = vmatprep.subr.mxu0 0.0
    %1442 = vmatpush1.msra.mxu0 %v1390
    %1443 = vmatprep.subr.mxu0 0.0
    %1444 = vmatpush2.msra.mxu0 0.0
    %1445 = vmatprep.subr.mxu0 0.0
    %1446 = vmatpush2.msra.mxu0 0.0
    %1447 = vmatprep.subr.mxu0 0.0
    %1448 = vmatpush2.msra.mxu0 0.0
    %1449 = vmatprep.subr.mxu0 0.0
    %1450 = vmatpush2.msra.mxu0 0.0
    %1451 = vmatprep.subr.mxu0 0.0
    %1452 = vmatpush2.msra.mxu0 0.0
    %1453 = vmatprep.subr.mxu0 0.0
    %1454 = vmatpush2.msra.mxu0 0.0
    %1455 = vmatprep.subr.mxu0 0.0
    %1456 = vmatpush2.msra.mxu0 0.0
    %1457 = vmatprep.subr.mxu0 0.0
    %1458 = vmatpush2.msra.mxu0 0.0
    %1459 = vmatprep.subr.mxu0 0.0
    %1460 = vmatpush2.msra.mxu0 0.0
    %1461 = vmatprep.subr.mxu0 0.0
    %1462 = vmatpush2.msra.mxu0 0.0
    %1463 = vmatprep.subr.mxu0 0.0
    %1464 = vmatpush2.msra.mxu0 0.0
    %1465 = vmatprep.subr.mxu0 0.0
    %1466 = vmatpush2.msra.mxu0 0.0
    %1467 = vmatprep.subr.mxu0 0.0
    %1468 = vmatpush2.msra.mxu0 0.0
    %1469 = vmatprep.subr.mxu0 0.0
    %1470 = vmatpush2.msra.mxu0 0.0
    %1471 = vmatprep.subr.mxu0 0.0
    %1472 = vmatpush2.msra.mxu0 0.0
    %1473 = vmatprep.subr.mxu0 0.0
    %1474 = vmatpush2.msra.mxu0 0.0
    %1475 = vmatprep.mubr.f32.mxu0 0.0
    %1476 = vmatmul.mubr.f32.gmra.mxu0 %v1403
    %v1477 = vpop.f32.mrf.mxu0
    %v1478 = vadd.f32 %v1400, %v1477
    %v1479 = vpop.f32.mrf.mxu0
    %1480 = vmatprep.mubr.f32.mxu0 0.0
    %1481 = vmatmul.mubr.f32.gmra.mxu0 %v1406
    %v1482 = vpop.f32.mrf.mxu0
    %v1483 = vadd.f32 %v1400, %v1482
    %v1484 = vpop.f32.mrf.mxu0
    %1485 = vmatprep.mubr.f32.mxu0 0.0
    %1486 = vmatmul.mubr.f32.gmra.mxu0 %v1409
    %v1487 = vpop.f32.mrf.mxu0
    %v1488 = vadd.f32 %v1400, %v1487
    %v1489 = vpop.f32.mrf.mxu0
    %1490 = vdwg.mxu0
    %v1491 = vmax.f32 %v1478, 0.0
    %v1492 = vmax.f32 %v1483, 0.0
    %v1493 = vmax.f32 %v1488, 0.0
    %s1494 = scalar_lea.vmem [#allocation9], 32
    %v1495 = vld [vmem:[%s1494] sm:$0xff]
    %v1496 = vld [vmem:[%s1494 + $0x8] sm:$0xff]
    %v1497 = vld [vmem:[%s1494 + $0x10] sm:$0xff]
    %v1498 = vld [vmem:[%s1494 + $0x18] sm:$0xff]
    %s1499 = scalar_lea.vmem [#allocation10], 1
    %v1500 = vld [vmem:[%s1499] sm:$0x1]
    %v1502 = vlaneseq
    %v1503 = vshrl.u32 %v1502, 7
    %v1504 = vsub.s32 0, %v1503
    %v1505 = vrot.slane %v1500, %v1504
    %v1508 = vsel %vm907, %v1491, 0
    %v1511 = vsel %vm907, %v1492, 0
    %v1514 = vsel %vm907, %v1493, 0
    %1516 = vmatprep.subr.mxu0 0.0
    %1517 = vmatpush1.msra.mxu0 0.0
    %1518 = vmatprep.subr.mxu0 0.0
    %1519 = vmatpush1.msra.mxu0 0.0
    %1520 = vmatprep.subr.mxu0 0.0
    %1521 = vmatpush1.msra.mxu0 0.0
    %1522 = vmatprep.subr.mxu0 0.0
    %1523 = vmatpush1.msra.mxu0 0.0
    %1524 = vmatprep.subr.mxu0 0.0
    %1525 = vmatpush1.msra.mxu0 0.0
    %1526 = vmatprep.subr.mxu0 0.0
    %1527 = vmatpush1.msra.mxu0 0.0
    %1528 = vmatprep.subr.mxu0 0.0
    %1529 = vmatpush1.msra.mxu0 0.0
    %1530 = vmatprep.subr.mxu0 0.0
    %1531 = vmatpush1.msra.mxu0 0.0
    %1532 = vmatprep.subr.mxu0 0.0
    %1533 = vmatpush1.msra.mxu0 0.0
    %1534 = vmatprep.subr.mxu0 0.0
    %1535 = vmatpush1.msra.mxu0 0.0
    %1536 = vmatprep.subr.mxu0 0.0
    %1537 = vmatpush1.msra.mxu0 0.0
    %1538 = vmatprep.subr.mxu0 0.0
    %1539 = vmatpush1.msra.mxu0 0.0
    %1540 = vmatprep.subr.mxu0 0.0
    %1541 = vmatpush1.msra.mxu0 %v1498
    %1542 = vmatprep.subr.mxu0 0.0
    %1543 = vmatpush1.msra.mxu0 %v1497
    %1544 = vmatprep.subr.mxu0 0.0
    %1545 = vmatpush1.msra.mxu0 %v1496
    %1546 = vmatprep.subr.mxu0 0.0
    %1547 = vmatpush1.msra.mxu0 %v1495
    %1548 = vmatprep.subr.mxu0 0.0
    %1549 = vmatpush2.msra.mxu0 0.0
    %1550 = vmatprep.subr.mxu0 0.0
    %1551 = vmatpush2.msra.mxu0 0.0
    %1552 = vmatprep.subr.mxu0 0.0
    %1553 = vmatpush2.msra.mxu0 0.0
    %1554 = vmatprep.subr.mxu0 0.0
    %1555 = vmatpush2.msra.mxu0 0.0
    %1556 = vmatprep.subr.mxu0 0.0
    %1557 = vmatpush2.msra.mxu0 0.0
    %1558 = vmatprep.subr.mxu0 0.0
    %1559 = vmatpush2.msra.mxu0 0.0
    %1560 = vmatprep.subr.mxu0 0.0
    %1561 = vmatpush2.msra.mxu0 0.0
    %1562 = vmatprep.subr.mxu0 0.0
    %1563 = vmatpush2.msra.mxu0 0.0
    %1564 = vmatprep.subr.mxu0 0.0
    %1565 = vmatpush2.msra.mxu0 0.0
    %1566 = vmatprep.subr.mxu0 0.0
    %1567 = vmatpush2.msra.mxu0 0.0
    %1568 = vmatprep.subr.mxu0 0.0
    %1569 = vmatpush2.msra.mxu0 0.0
    %1570 = vmatprep.subr.mxu0 0.0
    %1571 = vmatpush2.msra.mxu0 0.0
    %1572 = vmatprep.subr.mxu0 0.0
    %1573 = vmatpush2.msra.mxu0 0.0
    %1574 = vmatprep.subr.mxu0 0.0
    %1575 = vmatpush2.msra.mxu0 0.0
    %1576 = vmatprep.subr.mxu0 0.0
    %1577 = vmatpush2.msra.mxu0 0.0
    %1578 = vmatprep.subr.mxu0 0.0
    %1579 = vmatpush2.msra.mxu0 0.0
    %1580 = vmatprep.mubr.f32.mxu0 0.0
    %1581 = vmatmul.mubr.f32.gmra.mxu0 %v1508
    %v1582 = vpop.f32.mrf.mxu0
    %v1583 = vadd.f32 %v1505, %v1582
    %v1584 = vpop.f32.mrf.mxu0
    %1585 = vmatprep.mubr.f32.mxu0 0.0
    %1586 = vmatmul.mubr.f32.gmra.mxu0 %v1511
    %v1587 = vpop.f32.mrf.mxu0
    %v1588 = vadd.f32 %v1505, %v1587
    %v1589 = vpop.f32.mrf.mxu0
    %1590 = vmatprep.mubr.f32.mxu0 0.0
    %1591 = vmatmul.mubr.f32.gmra.mxu0 %v1514
    %v1592 = vpop.f32.mrf.mxu0
    %v1593 = vadd.f32 %v1505, %v1592
    %v1594 = vpop.f32.mrf.mxu0
    %1595 = vdwg.mxu0
    %v1596 = vld [vmem:[%s3] sm:$0x1]
    %v1597 = vlaneseq
    %v1598 = vshrl.u32 %v1597, 7
    %v1599 = vsub.s32 0, %v1598
    %v1600 = vrot.slane %v1596, %v1599
    %vm1601 = vcmp.eq.s32.totalorder %v494, %v1600
    %v1602 = vsel %vm1601, 1, 0
    %v1603 = vcvt.s32.f32 %v1602
    %v1605 = vsel %vm398, %v1603, 0
    %1607 = vmatprep.subr.mxu0 0.0
    %1608 = vmatpush1.msra.mxu0 0.0
    %1609 = vmatprep.subr.mxu0 0.0
    %1610 = vmatpush1.msra.mxu0 0.0
    %1611 = vmatprep.subr.mxu0 0.0
    %1612 = vmatpush1.msra.mxu0 0.0
    %1613 = vmatprep.subr.mxu0 0.0
    %1614 = vmatpush1.msra.mxu0 0.0
    %1615 = vmatprep.subr.mxu0 0.0
    %1616 = vmatpush1.msra.mxu0 0.0
    %1617 = vmatprep.subr.mxu0 0.0
    %1618 = vmatpush1.msra.mxu0 0.0
    %1619 = vmatprep.subr.mxu0 0.0
    %1620 = vmatpush1.msra.mxu0 0.0
    %1621 = vmatprep.subr.mxu0 0.0
    %1622 = vmatpush1.msra.mxu0 0.0
    %1623 = vmatprep.subr.mxu0 0.0
    %1624 = vmatpush1.msra.mxu0 0.0
    %1625 = vmatprep.subr.mxu0 0.0
    %1626 = vmatpush1.msra.mxu0 0.0
    %1627 = vmatprep.subr.mxu0 0.0
    %1628 = vmatpush1.msra.mxu0 0.0
    %1629 = vmatprep.subr.mxu0 0.0
    %1630 = vmatpush1.msra.mxu0 0.0
    %1631 = vmatprep.subr.mxu0 0.0
    %1632 = vmatpush1.msra.mxu0 0.0
    %1633 = vmatprep.subr.mxu0 0.0
    %1634 = vmatpush1.msra.mxu0 %v1593
    %1635 = vmatprep.subr.mxu0 0.0
    %1636 = vmatpush1.msra.mxu0 %v1588
    %1637 = vmatprep.subr.mxu0 0.0
    %1638 = vmatpush1.msra.mxu0 %v1583
    %1639 = vmatprep.subr.mxu0 0.0
    %1640 = vmatpush2.msra.mxu0 0.0
    %1641 = vmatprep.subr.mxu0 0.0
    %1642 = vmatpush2.msra.mxu0 0.0
    %1643 = vmatprep.subr.mxu0 0.0
    %1644 = vmatpush2.msra.mxu0 0.0
    %1645 = vmatprep.subr.mxu0 0.0
    %1646 = vmatpush2.msra.mxu0 0.0
    %1647 = vmatprep.subr.mxu0 0.0
    %1648 = vmatpush2.msra.mxu0 0.0
    %1649 = vmatprep.subr.mxu0 0.0
    %1650 = vmatpush2.msra.mxu0 0.0
    %1651 = vmatprep.subr.mxu0 0.0
    %1652 = vmatpush2.msra.mxu0 0.0
    %1653 = vmatprep.subr.mxu0 0.0
    %1654 = vmatpush2.msra.mxu0 0.0
    %1655 = vmatprep.subr.mxu0 0.0
    %1656 = vmatpush2.msra.mxu0 0.0
    %1657 = vmatprep.subr.mxu0 0.0
    %1658 = vmatpush2.msra.mxu0 0.0
    %1659 = vmatprep.subr.mxu0 0.0
    %1660 = vmatpush2.msra.mxu0 0.0
    %1661 = vmatprep.subr.mxu0 0.0
    %1662 = vmatpush2.msra.mxu0 0.0
    %1663 = vmatprep.subr.mxu0 0.0
    %1664 = vmatpush2.msra.mxu0 0.0
    %1665 = vmatprep.subr.mxu0 0.0
    %1666 = vmatpush2.msra.mxu0 0.0
    %1667 = vmatprep.subr.mxu0 0.0
    %1668 = vmatpush2.msra.mxu0 0.0
    %1669 = vmatprep.subr.mxu0 0.0
    %1670 = vmatpush2.msra.mxu0 0.0
    %1671 = vmatprep.mubr.f32.mxu0 0.0
    %1672 = vmatmul.mubr.f32.gmra.mxu0 %v1605
    %v1673 = vpop.f32.mrf.mxu0
    %v1674 = vadd.f32 0.0, %v1673
    %v1675 = vpop.f32.mrf.mxu0
    %1676 = vdwg.mxu0
    %v1677 = vld [vmem:[%s14] sm:$0xff]
    %v1678 = vld [vmem:[%s14 + $0x8] sm:$0xff]
    %v1679 = vld [vmem:[%s14 + $0x10] sm:$0xff]
    %v1680 = vld [vmem:[%s14 + $0x18] sm:$0xff]
    %v1681 = vld [vmem:[#allocation12] sm:$0x1]
    %v1683 = vlaneseq
    %v1684 = vshrl.u32 %v1683, 7
    %v1685 = vsub.s32 0, %v1684
    %v1686 = vrot.slane %v1681, %v1685
    %v1689 = vsel %vm907, %v1674, 0
    %1691 = vmatprep.subr.mxu0 0.0
    %1692 = vmatpush1.msra.mxu0 0.0
    %1693 = vmatprep.subr.mxu0 0.0
    %1694 = vmatpush1.msra.mxu0 0.0
    %1695 = vmatprep.subr.mxu0 0.0
    %1696 = vmatpush1.msra.mxu0 0.0
    %1697 = vmatprep.subr.mxu0 0.0
    %1698 = vmatpush1.msra.mxu0 0.0
    %1699 = vmatprep.subr.mxu0 0.0
    %1700 = vmatpush1.msra.mxu0 0.0
    %1701 = vmatprep.subr.mxu0 0.0
    %1702 = vmatpush1.msra.mxu0 0.0
    %1703 = vmatprep.subr.mxu0 0.0
    %1704 = vmatpush1.msra.mxu0 0.0
    %1705 = vmatprep.subr.mxu0 0.0
    %1706 = vmatpush1.msra.mxu0 0.0
    %1707 = vmatprep.subr.mxu0 0.0
    %1708 = vmatpush1.msra.mxu0 0.0
    %1709 = vmatprep.subr.mxu0 0.0
    %1710 = vmatpush1.msra.mxu0 0.0
    %1711 = vmatprep.subr.mxu0 0.0
    %1712 = vmatpush1.msra.mxu0 0.0
    %1713 = vmatprep.subr.mxu0 0.0
    %1714 = vmatpush1.msra.mxu0 0.0
    %1715 = vmatprep.subr.mxu0 0.0
    %1716 = vmatpush1.msra.mxu0 %v1680
    %1717 = vmatprep.subr.mxu0 0.0
    %1718 = vmatpush1.msra.mxu0 %v1679
    %1719 = vmatprep.subr.mxu0 0.0
    %1720 = vmatpush1.msra.mxu0 %v1678
    %1721 = vmatprep.subr.mxu0 0.0
    %1722 = vmatpush1.msra.mxu0 %v1677
    %1723 = vmatprep.subr.mxu0 0.0
    %1724 = vmatpush2.msra.mxu0 0.0
    %1725 = vmatprep.subr.mxu0 0.0
    %1726 = vmatpush2.msra.mxu0 0.0
    %1727 = vmatprep.subr.mxu0 0.0
    %1728 = vmatpush2.msra.mxu0 0.0
    %1729 = vmatprep.subr.mxu0 0.0
    %1730 = vmatpush2.msra.mxu0 0.0
    %1731 = vmatprep.subr.mxu0 0.0
    %1732 = vmatpush2.msra.mxu0 0.0
    %1733 = vmatprep.subr.mxu0 0.0
    %1734 = vmatpush2.msra.mxu0 0.0
    %1735 = vmatprep.subr.mxu0 0.0
    %1736 = vmatpush2.msra.mxu0 0.0
    %1737 = vmatprep.subr.mxu0 0.0
    %1738 = vmatpush2.msra.mxu0 0.0
    %1739 = vmatprep.subr.mxu0 0.0
    %1740 = vmatpush2.msra.mxu0 0.0
    %1741 = vmatprep.subr.mxu0 0.0
    %1742 = vmatpush2.msra.mxu0 0.0
    %1743 = vmatprep.subr.mxu0 0.0
    %1744 = vmatpush2.msra.mxu0 0.0
    %1745 = vmatprep.subr.mxu0 0.0
    %1746 = vmatpush2.msra.mxu0 0.0
    %1747 = vmatprep.subr.mxu0 0.0
    %1748 = vmatpush2.msra.mxu0 0.0
    %1749 = vmatprep.subr.mxu0 0.0
    %1750 = vmatpush2.msra.mxu0 0.0
    %1751 = vmatprep.subr.mxu0 0.0
    %1752 = vmatpush2.msra.mxu0 0.0
    %1753 = vmatprep.subr.mxu0 0.0
    %1754 = vmatpush2.msra.mxu0 0.0
    %1755 = vmatprep.mubr.f32.mxu0 0.0
    %1756 = vmatmul.mubr.f32.gmra.mxu0 %v1689
    %v1757 = vpop.f32.mrf.mxu0
    %v1758 = vadd.f32 %v1686, %v1757
    %v1759 = vpop.f32.mrf.mxu0
    %1760 = vdwg.mxu0
    %1761 = vst [vmem:[%s16] sm:$0xff] %v1758
    // Predicated region
    $region94: #{net_forward.1} parent=1 // pred_check
      _
    $region95: #{net_forward.1} parent=1 // pred_check_branch
      %1763 = sbr.rel (0) target = $region97
    $region96: #{net_forward.1} parent=1 // pred_region
      _
    $region97: #{net_forward.1} parent=1 // pred_fallthru
      _
    // Predicated region
    $region98: #{net_forward.1} parent=1 // pred_check
      _
    $region99: #{net_forward.1} parent=1 // pred_check_branch
      %1765 = sbr.rel (0) target = $region101
    $region100: #{net_forward.1} parent=1 // pred_region
      _
    $region101: #{net_forward.1} parent=1 // pred_fallthru
      _
    %1766 = vsyncpa [#allocation3], 1
    %1767 = vsyncpa [#allocation5], 1
    %1768 = vsyncpa [#allocation8], 1
    %1769 = vsyncpa [#allocation11], 1

</llo_original>
